<compile_context>
chip_gen: v7x
topology: tpu7x:2x2x1
jax: 0.10.0
libtpu: 0.0.40
codegen_flags: <defaults>
</compile_context>

<pallas_src>
import functools

import jax
import jax.numpy as jnp
from jax import lax
from jax.experimental import pallas as pl
from jax.experimental.pallas import tpu as pltpu


def _soca_scale_kernel(x_ref, wa_ref, ba_ref, wb_ref, bb_ref, scale_ref,
                       gram_ref, ssum_ref, *, iter_n, m_total, width, crop,
                       ms_count):
    """Accumulate Gram/sums over spatial tiles; finalize the scale on the last."""
    f32 = jnp.float32
    m_idx = pl.program_id(1)
    n_m = pl.num_programs(1)

    @pl.when(m_idx == 0)
    def _init():
        gram_ref[...] = jnp.zeros_like(gram_ref)
        ssum_ref[...] = jnp.zeros_like(ssum_ref)

    xc = x_ref[0]                                     # (C, TM), original dtype
    tm = xc.shape[1]

    # Static decision: mask (a) the padded tail of the last tile when TM does
    # not divide M, and (b) positions outside the 150x150 centre crop.
    needs_mask = (crop is not None) or (m_total % tm != 0)
    if needs_mask:
        pos = lax.broadcasted_iota(jnp.int32, (1, tm), 1) + m_idx * tm
        valid = pos < m_total
        if crop is not None:
            ho, hs, wo, ws = crop
            rr = pos // width
            cc = pos - rr * width
            valid = (valid & (rr >= ho) & (rr < ho + hs)
                     & (cc >= wo) & (cc < wo + ws))
        xc = jnp.where(valid, xc, jnp.zeros_like(xc))

    # Chunked Gram accumulation on the MXU (native-dtype operands, f32 accum).
    gram_ref[...] += lax.dot_general(xc, xc, (((1,), (1,)), ((), ())),
                                     preferred_element_type=f32)
    ssum_ref[...] += jnp.sum(xc.astype(f32), axis=1, keepdims=True)

    @pl.when(m_idx == n_m - 1)
    def _finalize():
        C = gram_ref.shape[0]
        inv_ms = 1.0 / float(ms_count)
        mean = ssum_ref[...] * inv_ms                              # (C, 1)
        # cov = x_sub @ I_hat @ x_sub^T  ==  Gram/Ms - mean @ mean^T
        cov = gram_ref[...] * inv_ms - lax.dot_general(
            mean, mean, (((1,), (1,)), ((), ())), preferred_element_type=f32)

        # ---- MPNCOV.SqrtmLayer (Newton-Schulz, iter_n steps) ----------------
        row = lax.broadcasted_iota(jnp.int32, (C, C), 0)
        col = lax.broadcasted_iota(jnp.int32, (C, C), 1)
        eye = (row == col).astype(f32)
        i3 = 3.0 * eye
        norm_a = jnp.sum(cov * eye, axis=(0, 1), keepdims=True)    # trace (1,1)
        a = cov * pl.reciprocal(norm_a)

        zy = 0.5 * (i3 - a)
        y = jnp.dot(a, zy, preferred_element_type=f32)
        z = zy
        for _ in range(1, iter_n - 1):
            zy = 0.5 * (i3 - jnp.dot(z, y, preferred_element_type=f32))
            y_new = jnp.dot(y, zy, preferred_element_type=f32)
            z = jnp.dot(zy, z, preferred_element_type=f32)
            y = y_new
        zy = 0.5 * jnp.dot(y, i3 - jnp.dot(z, y, preferred_element_type=f32),
                           preferred_element_type=f32)
        sqrtm = zy * jnp.sqrt(norm_a)                              # (C, C)

        # ---- torch.mean(cov_mat_sqrt, dim=1): column means, as a row --------
        v_row = jnp.mean(sqrtm, axis=0, keepdims=True)             # (1, C)

        # ---- conv_du: 1x1 conv -> ReLU -> 1x1 conv -> Sigmoid ---------------
        # conv1 as VPU broadcast-multiply + lane reduction (no N=1 MXU dot).
        h = jnp.sum(wa_ref[...] * v_row, axis=1, keepdims=True) + ba_ref[...]
        h = jnp.maximum(h, 0.0)                                    # (Cr, 1)
        # conv2 as a tiny dot so the result lands column-oriented (C, 1).
        logits = (jnp.dot(wb_ref[...], h, preferred_element_type=f32)
                  + bb_ref[...])
        scale_ref[0] = jax.nn.sigmoid(logits).astype(scale_ref.dtype)


def _soca_apply_kernel(x_ref, scale_ref, out_ref):
    """out = per-channel scale * x, tiled over the flattened spatial axis."""
    out_ref[0] = (x_ref[0].astype(jnp.float32)
                  * scale_ref[0]).astype(out_ref.dtype)


def soca_forward(x, wa, ba, wb, bb, *, iter_n=5, tile_cov=2048, tile_apply=4096):
    """x: (B, C, H, W) NCHW. wa: (C//r, C), ba: (C//r,), wb: (C, C//r), bb: (C,)."""
    assert iter_n >= 2, "Newton-Schulz path assumes iterN >= 2 (module uses 5)."
    B, C, H, W = x.shape
    H1 = W1 = 150

    # Static centre-crop selection, mirroring the PyTorch conditionals exactly.
    # (As in the original module, shapes such as H < 150, W == 150 fall through
    #  to the last branch; that quirk is preserved on purpose.)
    if H < H1 and W < W1:
        crop = None
        ms = H * W
    elif H < H1 and W > W1:
        wo = (W - W1) // 2
        crop = (0, H, wo, W1)
        ms = H * W1
    elif W < W1 and H > H1:
        ho = (H - H1) // 2
        crop = (ho, H1, 0, W)
        ms = H1 * W
    else:
        ho = (H - H1) // 2
        wo = (W - W1) // 2
        crop = (ho, H1, wo, W1)
        ms = H1 * W1

    M = H * W
    xf = x.reshape(B, C, M)                 # free reshape: no copy, no upcast
    Cr = wa.shape[0]
    f32 = jnp.float32
    wa_f = wa.astype(f32)
    wb_f = wb.astype(f32)
    ba_col = ba.reshape(Cr, 1).astype(f32)
    bb_col = bb.reshape(C, 1).astype(f32)

    # --- Kernel A: per-(batch, channel) attention scale ----------------------
    tm_a = M if M <= tile_cov else tile_cov            # tile_cov % 128 == 0
    n_m_a = -(-M // tm_a)
    scale_kernel = functools.partial(
        _soca_scale_kernel, iter_n=iter_n, m_total=M, width=W, crop=crop,
        ms_count=ms)
    scale = pl.pallas_call(
        scale_kernel,
        out_shape=jax.ShapeDtypeStruct((B, C, 1), f32),
        grid=(B, n_m_a),
        in_specs=[
            pl.BlockSpec((1, C, tm_a), lambda b, m: (b, 0, m)),    # x tile
            pl.BlockSpec((Cr, C), lambda b, m: (0, 0)),            # conv1 weight
            pl.BlockSpec((Cr, 1), lambda b, m: (0, 0)),            # conv1 bias
            pl.BlockSpec((C, Cr), lambda b, m: (0, 0)),            # conv2 weight
            pl.BlockSpec((C, 1), lambda b, m: (0, 0)),             # conv2 bias
        ],
        out_specs=pl.BlockSpec((1, C, 1), lambda b, m: (b, 0, 0)),
        scratch_shapes=[pltpu.VMEM((C, C), f32),                   # Gram accum
                        pltpu.VMEM((C, 1), f32)],                  # channel sums
        compiler_params=pltpu.CompilerParams(
            dimension_semantics=("parallel", "arbitrary")),
    )(xf, wa_f, ba_col, wb_f, bb_col)

    # --- Kernel B: broadcast-multiply, fully parallel over (B, M tiles) ------
    tm_b = M if M <= tile_apply else tile_apply        # tile_apply % 128 == 0
    n_m_b = -(-M // tm_b)
    out = pl.pallas_call(
        _soca_apply_kernel,
        out_shape=jax.ShapeDtypeStruct((B, C, M), x.dtype),
        grid=(B, n_m_b),
        in_specs=[
            pl.BlockSpec((1, C, tm_b), lambda b, m: (b, 0, m)),    # x tile
            pl.BlockSpec((1, C, 1), lambda b, m: (b, 0, 0)),       # scale
        ],
        out_specs=pl.BlockSpec((1, C, tm_b), lambda b, m: (b, 0, m)),
        compiler_params=pltpu.CompilerParams(
            dimension_semantics=("parallel", "parallel")),
    )(xf, scale)
    return out.reshape(B, C, H, W)


def _soca_reference(x, wa, ba, wb, bb, iter_n=5):
    """Pure-JAX reference (no-crop shapes), mirroring the PyTorch module."""
    B, C, H, W = x.shape
    M = H * W
    xs = x.reshape(B, C, M).astype(jnp.float32)
    i_hat = (jnp.eye(M, dtype=jnp.float32) / M
             - jnp.ones((M, M), jnp.float32) / (M * M))
    cov = jnp.einsum("bcm,mn,bdn->bcd", xs, i_hat, xs)
    eye = jnp.eye(C, dtype=jnp.float32)
    i3 = 3.0 * eye
    tr = jnp.trace(cov, axis1=1, axis2=2)[:, None, None]
    a = cov / tr
    zy = 0.5 * (i3 - a)
    y = a @ zy
    z = zy
    for _ in range(1, iter_n - 1):
        zy = 0.5 * (i3 - z @ y)
        y, z = y @ zy, zy @ z
    zy = 0.5 * (y @ (i3 - z @ y))
    sqrtm = zy * jnp.sqrt(tr)
    v = jnp.mean(sqrtm, axis=1)                          # (B, C)
    h = jnp.maximum(v @ wa.T + ba, 0.0)                  # (B, Cr)
    s = jax.nn.sigmoid(h @ wb.T + bb)                    # (B, C)
    return s[:, :, None, None] * x


if __name__ == "__main__":
    key = jax.random.PRNGKey(0)
    B, C, H, W = 2, 8, 16, 16
    reduction = 4
    Cr = C // reduction

    k1, k2, k3, k4, k5 = jax.random.split(key, 5)
    x = jax.random.normal(k1, (B, C, H, W), jnp.float32)
    wa = jax.random.normal(k2, (Cr, C), jnp.float32) * 0.1    # conv1 1x1 weight
    ba = jax.random.normal(k3, (Cr,), jnp.float32) * 0.1      # conv1 bias
    wb = jax.random.normal(k4, (C, Cr), jnp.float32) * 0.1    # conv2 1x1 weight
    bb = jax.random.normal(k5, (C,), jnp.float32) * 0.1       # conv2 bias

    out = soca_forward(x, wa, ba, wb, bb)
    jax.block_until_ready(out)
    assert out.shape == (B, C, H, W)

    ref = _soca_reference(x, wa, ba, wb, bb)
    err = float(jnp.max(jnp.abs(out - ref)))
    assert err < 5e-2, f"max abs error vs reference: {err}"
    print("KERNEL_OK")
</pallas_src>

<mosaic_0001>
module attributes {stable_mosaic.version = 11 : i64} {
  func.func @_soca_scale_kernel(%arg0: i32, %arg1: i32, %arg2: memref<1x8x256xf32, #tpu.memory_space<vmem>>, %arg3: memref<2x8xf32, #tpu.memory_space<vmem>>, %arg4: memref<2x1xf32, #tpu.memory_space<vmem>>, %arg5: memref<8x2xf32, #tpu.memory_space<vmem>>, %arg6: memref<8x1xf32, #tpu.memory_space<vmem>>, %arg7: memref<1x8x1xf32, #tpu.memory_space<vmem>>, %arg8: memref<8x8xf32, #tpu.memory_space<vmem>>, %arg9: memref<8x1xf32, #tpu.memory_space<vmem>>) attributes {dimension_semantics = [#tpu.dimension_semantics<parallel>, #tpu.dimension_semantics<arbitrary>], iteration_bounds = array<i64: 2, 1>, scalar_prefetch = 0 : i64, scratch_operands = 2 : i64, tpu.core_type = #tpu.core_type<tc>, window_params = [{transform_indices = @transform_0, window_bounds = array<i64: 1, 8, 256>}, {pipeline_mode = #tpu.pipeline_mode<synchronous>, transform_indices = @transform_1, window_bounds = array<i64: 2, 8>}, {pipeline_mode = #tpu.pipeline_mode<synchronous>, transform_indices = @transform_2, window_bounds = array<i64: 2, 1>}, {pipeline_mode = #tpu.pipeline_mode<synchronous>, transform_indices = @transform_3, window_bounds = array<i64: 8, 2>}, {pipeline_mode = #tpu.pipeline_mode<synchronous>, transform_indices = @transform_4, window_bounds = array<i64: 8, 1>}, {transform_indices = @transform_5, window_bounds = array<i64: 1, 8, 1>}]} {
    %c0_i32 = arith.constant 0 : i32
    %0 = arith.cmpi eq, %arg1, %c0_i32 : i32
    %1 = arith.extui %0 : i1 to i32
    %c0_i32_0 = arith.constant 0 : i32
    %2 = arith.cmpi ne, %1, %c0_i32_0 : i32
    scf.if %2 {
      %cst_14 = arith.constant 0.000000e+00 : f32
      %17 = vector.broadcast %cst_14 : f32 to vector<8x8xf32>
      %c0_15 = arith.constant 0 : index
      %c0_16 = arith.constant 0 : index
      %18 = vector.load %arg8[%c0_15, %c0_16] : memref<8x8xf32, #tpu.memory_space<vmem>>, vector<8x8xf32>
      tpu.vector_store %arg8[%c0_15, %c0_16], %17 {strides = array<i32>} : memref<8x8xf32, #tpu.memory_space<vmem>>, vector<8x8xf32>,
      %cst_17 = arith.constant 0.000000e+00 : f32
      %19 = vector.broadcast %cst_17 : f32 to vector<8x1xf32>
      %c0_18 = arith.constant 0 : index
      %c0_19 = arith.constant 0 : index
      %20 = vector.load %arg9[%c0_18, %c0_19] : memref<8x1xf32, #tpu.memory_space<vmem>>, vector<8x1xf32>
      tpu.vector_store %arg9[%c0_18, %c0_19], %19 {strides = array<i32>} : memref<8x1xf32, #tpu.memory_space<vmem>>, vector<8x1xf32>,
    } else {
    }
    %c0 = arith.constant 0 : index
    %c0_1 = arith.constant 0 : index
    %c0_2 = arith.constant 0 : index
    %3 = vector.load %arg2[%c0, %c0_1, %c0_2] : memref<1x8x256xf32, #tpu.memory_space<vmem>>, vector<1x8x256xf32>
    %4 = vector.shape_cast %3 : vector<1x8x256xf32> to vector<8x256xf32>
    %c0_3 = arith.constant 0 : index
    %c0_4 = arith.constant 0 : index
    %5 = vector.load %arg8[%c0_3, %c0_4] : memref<8x8xf32, #tpu.memory_space<vmem>>, vector<8x8xf32>
    %cst = arith.constant dense<0.000000e+00> : vector<8x8xf32>
    %6 = tpu.matmul %4, %4, %cst {dimension_numbers = #tpu.dot_dimension_numbers<[1], [1], [0], [0], [0, 0, 1, 0], [], []>} : vector<8x256xf32>, vector<8x256xf32>, vector<8x8xf32> -> vector<8x8xf32>
    %7 = arith.addf %5, %6 : vector<8x8xf32>
    %c0_5 = arith.constant 0 : index
    %c0_6 = arith.constant 0 : index
    %8 = vector.load %arg8[%c0_5, %c0_6] : memref<8x8xf32, #tpu.memory_space<vmem>>, vector<8x8xf32>
    tpu.vector_store %arg8[%c0_5, %c0_6], %7 {strides = array<i32>} : memref<8x8xf32, #tpu.memory_space<vmem>>, vector<8x8xf32>,
    %c0_7 = arith.constant 0 : index
    %c0_8 = arith.constant 0 : index
    %9 = vector.load %arg9[%c0_7, %c0_8] : memref<8x1xf32, #tpu.memory_space<vmem>>, vector<8x1xf32>
    %cst_9 = arith.constant dense<0.000000e+00> : vector<8xf32>
    %10 = vector.multi_reduction <add>, %4, %cst_9 [1] : vector<8x256xf32> to vector<8xf32>
    %11 = vector.shape_cast %10 : vector<8xf32> to vector<8x1xf32>
    %12 = arith.addf %9, %11 : vector<8x1xf32>
    %c0_10 = arith.constant 0 : index
    %c0_11 = arith.constant 0 : index
    %13 = vector.load %arg9[%c0_10, %c0_11] : memref<8x1xf32, #tpu.memory_space<vmem>>, vector<8x1xf32>
    tpu.vector_store %arg9[%c0_10, %c0_11], %12 {strides = array<i32>} : memref<8x1xf32, #tpu.memory_space<vmem>>, vector<8x1xf32>,
    %c0_i32_12 = arith.constant 0 : i32
    %14 = arith.cmpi eq, %arg1, %c0_i32_12 : i32
    %15 = arith.extui %14 : i1 to i32
    %c0_i32_13 = arith.constant 0 : i32
    %16 = arith.cmpi ne, %15, %c0_i32_13 : i32
    scf.if %16 {
      %c0_14 = arith.constant 0 : index
      %c0_15 = arith.constant 0 : index
      %17 = vector.load %arg9[%c0_14, %c0_15] : memref<8x1xf32, #tpu.memory_space<vmem>>, vector<8x1xf32>
      %cst_16 = arith.constant 3.906250e-03 : f32
      %18 = vector.broadcast %cst_16 : f32 to vector<8x1xf32>
      %19 = arith.mulf %17, %18 : vector<8x1xf32>
      %c0_17 = arith.constant 0 : index
      %c0_18 = arith.constant 0 : index
      %20 = vector.load %arg8[%c0_17, %c0_18] : memref<8x8xf32, #tpu.memory_space<vmem>>, vector<8x8xf32>
      %cst_19 = arith.constant 3.906250e-03 : f32
      %21 = vector.broadcast %cst_19 : f32 to vector<8x8xf32>
      %22 = arith.mulf %20, %21 : vector<8x8xf32>
      %cst_20 = arith.constant dense<0.000000e+00> : vector<8x8xf32>
      %23 = tpu.matmul %19, %19, %cst_20 {dimension_numbers = #tpu.dot_dimension_numbers<[1], [1], [0], [0], [0, 0, 1, 0], [], []>} : vector<8x1xf32>, vector<8x1xf32>, vector<8x8xf32> -> vector<8x8xf32>
      %24 = arith.subf %22, %23 : vector<8x8xf32>
      %25 = tpu.iota {dimensions = array<i32: 0>} : vector<8x8xi32>
      %26 = tpu.iota {dimensions = array<i32: 1>} : vector<8x8xi32>
      %27 = arith.cmpi eq, %25, %26 : vector<8x8xi32>
      %28 = arith.extui %27 : vector<8x8xi1> to vector<8x8xi32>
      %29 = arith.sitofp %28 : vector<8x8xi32> to vector<8x8xf32>
      %cst_21 = arith.constant 3.000000e+00 : f32
      %30 = vector.broadcast %cst_21 : f32 to vector<8x8xf32>
      %31 = arith.mulf %30, %29 : vector<8x8xf32>
      %32 = arith.mulf %24, %29 : vector<8x8xf32>
      %33 = vector.shape_cast %32 : vector<8x8xf32> to vector<1x8x8xf32>
      %cst_22 = arith.constant dense<0.000000e+00> : vector<1xf32>
      %34 = vector.multi_reduction <add>, %33, %cst_22 [1, 2] : vector<1x8x8xf32> to vector<1xf32>
      %35 = vector.shape_cast %34 : vector<1xf32> to vector<1x1x1xf32>
      %36 = vector.extract %35[0, 0, 0] : f32 from vector<1x1x1xf32>
      %37 = vector.broadcast %36 : f32 to vector<1x1xf32>
      %38 = tpu.reciprocal %37 : vector<1x1xf32> -> vector<1x1xf32>
      %39 = vector.broadcast %38 : vector<1x1xf32> to vector<8x8xf32>
      %40 = arith.mulf %24, %39 : vector<8x8xf32>
      %41 = arith.subf %31, %40 : vector<8x8xf32>
      %cst_23 = arith.constant 5.000000e-01 : f32
      %42 = vector.broadcast %cst_23 : f32 to vector<8x8xf32>
      %43 = arith.mulf %42, %41 : vector<8x8xf32>
      %cst_24 = arith.constant dense<0.000000e+00> : vector<8x8xf32>
      %44 = tpu.matmul %40, %43, %cst_24 {dimension_numbers = #tpu.dot_dimension_numbers<[1], [0], [0], [1], [0, 0, 1, 1], [], []>} : vector<8x8xf32>, vector<8x8xf32>, vector<8x8xf32> -> vector<8x8xf32>
      %cst_25 = arith.constant dense<0.000000e+00> : vector<8x8xf32>
      %45 = tpu.matmul %43, %44, %cst_25 {dimension_numbers = #tpu.dot_dimension_numbers<[1], [0], [0], [1], [0, 0, 1, 1], [], []>} : vector<8x8xf32>, vector<8x8xf32>, vector<8x8xf32> -> vector<8x8xf32>
      %46 = arith.subf %31, %45 : vector<8x8xf32>
      %cst_26 = arith.constant 5.000000e-01 : f32
      %47 = vector.broadcast %cst_26 : f32 to vector<8x8xf32>
      %48 = arith.mulf %47, %46 : vector<8x8xf32>
      %cst_27 = arith.constant dense<0.000000e+00> : vector<8x8xf32>
      %49 = tpu.matmul %44, %48, %cst_27 {dimension_numbers = #tpu.dot_dimension_numbers<[1], [0], [0], [1], [0, 0, 1, 1], [], []>} : vector<8x8xf32>, vector<8x8xf32>, vector<8x8xf32> -> vector<8x8xf32>
      %cst_28 = arith.constant dense<0.000000e+00> : vector<8x8xf32>
      %50 = tpu.matmul %48, %43, %cst_28 {dimension_numbers = #tpu.dot_dimension_numbers<[1], [0], [0], [1], [0, 0, 1, 1], [], []>} : vector<8x8xf32>, vector<8x8xf32>, vector<8x8xf32> -> vector<8x8xf32>
      %cst_29 = arith.constant dense<0.000000e+00> : vector<8x8xf32>
      %51 = tpu.matmul %50, %49, %cst_29 {dimension_numbers = #tpu.dot_dimension_numbers<[1], [0], [0], [1], [0, 0, 1, 1], [], []>} : vector<8x8xf32>, vector<8x8xf32>, vector<8x8xf32> -> vector<8x8xf32>
      %52 = arith.subf %31, %51 : vector<8x8xf32>
      %cst_30 = arith.constant 5.000000e-01 : f32
      %53 = vector.broadcast %cst_30 : f32 to vector<8x8xf32>
      %54 = arith.mulf %53, %52 : vector<8x8xf32>
      %cst_31 = arith.constant dense<0.000000e+00> : vector<8x8xf32>
      %55 = tpu.matmul %49, %54, %cst_31 {dimension_numbers = #tpu.dot_dimension_numbers<[1], [0], [0], [1], [0, 0, 1, 1], [], []>} : vector<8x8xf32>, vector<8x8xf32>, vector<8x8xf32> -> vector<8x8xf32>
      %cst_32 = arith.constant dense<0.000000e+00> : vector<8x8xf32>
      %56 = tpu.matmul %54, %50, %cst_32 {dimension_numbers = #tpu.dot_dimension_numbers<[1], [0], [0], [1], [0, 0, 1, 1], [], []>} : vector<8x8xf32>, vector<8x8xf32>, vector<8x8xf32> -> vector<8x8xf32>
      %cst_33 = arith.constant dense<0.000000e+00> : vector<8x8xf32>
      %57 = tpu.matmul %56, %55, %cst_33 {dimension_numbers = #tpu.dot_dimension_numbers<[1], [0], [0], [1], [0, 0, 1, 1], [], []>} : vector<8x8xf32>, vector<8x8xf32>, vector<8x8xf32> -> vector<8x8xf32>
      %58 = arith.subf %31, %57 : vector<8x8xf32>
      %cst_34 = arith.constant 5.000000e-01 : f32
      %59 = vector.broadcast %cst_34 : f32 to vector<8x8xf32>
      %60 = arith.mulf %59, %58 : vector<8x8xf32>
      %cst_35 = arith.constant dense<0.000000e+00> : vector<8x8xf32>
      %61 = tpu.matmul %55, %60, %cst_35 {dimension_numbers = #tpu.dot_dimension_numbers<[1], [0], [0], [1], [0, 0, 1, 1], [], []>} : vector<8x8xf32>, vector<8x8xf32>, vector<8x8xf32> -> vector<8x8xf32>
      %cst_36 = arith.constant dense<0.000000e+00> : vector<8x8xf32>
      %62 = tpu.matmul %60, %56, %cst_36 {dimension_numbers = #tpu.dot_dimension_numbers<[1], [0], [0], [1], [0, 0, 1, 1], [], []>} : vector<8x8xf32>, vector<8x8xf32>, vector<8x8xf32> -> vector<8x8xf32>
      %cst_37 = arith.constant dense<0.000000e+00> : vector<8x8xf32>
      %63 = tpu.matmul %62, %61, %cst_37 {dimension_numbers = #tpu.dot_dimension_numbers<[1], [0], [0], [1], [0, 0, 1, 1], [], []>} : vector<8x8xf32>, vector<8x8xf32>, vector<8x8xf32> -> vector<8x8xf32>
      %64 = arith.subf %31, %63 : vector<8x8xf32>
      %cst_38 = arith.constant dense<0.000000e+00> : vector<8x8xf32>
      %65 = tpu.matmul %61, %64, %cst_38 {dimension_numbers = #tpu.dot_dimension_numbers<[1], [0], [0], [1], [0, 0, 1, 1], [], []>} : vector<8x8xf32>, vector<8x8xf32>, vector<8x8xf32> -> vector<8x8xf32>
      %cst_39 = arith.constant 5.000000e-01 : f32
      %66 = vector.broadcast %cst_39 : f32 to vector<8x8xf32>
      %67 = arith.mulf %66, %65 : vector<8x8xf32>
      %68 = math.sqrt %37 : vector<1x1xf32>
      %69 = vector.broadcast %68 : vector<1x1xf32> to vector<8x8xf32>
      %70 = arith.mulf %67, %69 : vector<8x8xf32>
      %cst_40 = arith.constant dense<0.000000e+00> : vector<8xf32>
      %71 = vector.multi_reduction <add>, %70, %cst_40 [0] : vector<8x8xf32> to vector<8xf32>
      %72 = vector.shape_cast %71 : vector<8xf32> to vector<1x8xf32>
      %cst_41 = arith.constant 8.000000e+00 : f32
      %73 = vector.broadcast %cst_41 : f32 to vector<1x8xf32>
      %74 = arith.divf %72, %73 : vector<1x8xf32>
      %c0_42 = arith.constant 0 : index
      %c0_43 = arith.constant 0 : index
      %75 = vector.load %arg3[%c0_42, %c0_43] : memref<2x8xf32, #tpu.memory_space<vmem>>, vector<2x8xf32>
      %76 = vector.broadcast %74 : vector<1x8xf32> to vector<2x8xf32>
      %77 = arith.mulf %75, %76 : vector<2x8xf32>
      %cst_44 = arith.constant dense<0.000000e+00> : vector<2xf32>
      %78 = vector.multi_reduction <add>, %77, %cst_44 [1] : vector<2x8xf32> to vector<2xf32>
      %79 = vector.shape_cast %78 : vector<2xf32> to vector<2x1xf32>
      %c0_45 = arith.constant 0 : index
      %c0_46 = arith.constant 0 : index
      %80 = vector.load %arg4[%c0_45, %c0_46] : memref<2x1xf32, #tpu.memory_space<vmem>>, vector<2x1xf32>
      %81 = arith.addf %79, %80 : vector<2x1xf32>
      %cst_47 = arith.constant 0.000000e+00 : f32
      %82 = vector.broadcast %cst_47 : f32 to vector<2x1xf32>
      %83 = arith.maximumf %81, %82 : vector<2x1xf32>
      %c0_48 = arith.constant 0 : index
      %c0_49 = arith.constant 0 : index
      %84 = vector.load %arg5[%c0_48, %c0_49] : memref<8x2xf32, #tpu.memory_space<vmem>>, vector<8x2xf32>
      %cst_50 = arith.constant dense<0.000000e+00> : vector<8x1xf32>
      %85 = tpu.matmul %84, %83, %cst_50 {dimension_numbers = #tpu.dot_dimension_numbers<[1], [0], [0], [1], [0, 0, 1, 1], [], []>} : vector<8x2xf32>, vector<2x1xf32>, vector<8x1xf32> -> vector<8x1xf32>
      %c0_51 = arith.constant 0 : index
      %c0_52 = arith.constant 0 : index
      %86 = vector.load %arg6[%c0_51, %c0_52] : memref<8x1xf32, #tpu.memory_space<vmem>>, vector<8x1xf32>
      %87 = arith.addf %85, %86 : vector<8x1xf32>
      %88 = arith.negf %87 : vector<8x1xf32>
      %89 = math.exp %88 : vector<8x1xf32>
      %cst_53 = arith.constant 1.000000e+00 : f32
      %90 = vector.broadcast %cst_53 : f32 to vector<8x1xf32>
      %91 = arith.addf %90, %89 : vector<8x1xf32>
      %92 = arith.divf %90, %91 : vector<8x1xf32>
      %c0_54 = arith.constant 0 : index
      %c0_55 = arith.constant 0 : index
      %c0_56 = arith.constant 0 : index
      %93 = vector.load %arg7[%c0_54, %c0_55, %c0_56] : memref<1x8x1xf32, #tpu.memory_space<vmem>>, vector<1x8x1xf32>
      %94 = vector.shape_cast %93 : vector<1x8x1xf32> to vector<8x1xf32>
      %95 = vector.shape_cast %92 : vector<8x1xf32> to vector<1x8x1xf32>
      tpu.vector_store %arg7[%c0_54, %c0_55, %c0_56], %95 {strides = array<i32>} : memref<1x8x1xf32, #tpu.memory_space<vmem>>, vector<1x8x1xf32>,
    } else {
    }
    return
  }
  func.func @transform_0(%arg0: i32, %arg1: i32) -> (i32, i32, i32) {
    %c0_i32 = arith.constant 0 : i32
    %c0_i32_0 = arith.constant 0 : i32
    return %arg0, %c0_i32, %arg1 : i32, i32, i32
  }
  func.func @transform_1(%arg0: i32, %arg1: i32) -> (i32, i32) {
    %c0_i32 = arith.constant 0 : i32
    %c0_i32_0 = arith.constant 0 : i32
    %c0_i32_1 = arith.constant 0 : i32
    return %c0_i32, %c0_i32_0 : i32, i32
  }
  func.func @transform_2(%arg0: i32, %arg1: i32) -> (i32, i32) {
    %c0_i32 = arith.constant 0 : i32
    %c0_i32_0 = arith.constant 0 : i32
    %c0_i32_1 = arith.constant 0 : i32
    return %c0_i32, %c0_i32_0 : i32, i32
  }
  func.func @transform_3(%arg0: i32, %arg1: i32) -> (i32, i32) {
    %c0_i32 = arith.constant 0 : i32
    %c0_i32_0 = arith.constant 0 : i32
    %c0_i32_1 = arith.constant 0 : i32
    return %c0_i32, %c0_i32_0 : i32, i32
  }
  func.func @transform_4(%arg0: i32, %arg1: i32) -> (i32, i32) {
    %c0_i32 = arith.constant 0 : i32
    %c0_i32_0 = arith.constant 0 : i32
    %c0_i32_1 = arith.constant 0 : i32
    return %c0_i32, %c0_i32_0 : i32, i32
  }
  func.func @transform_5(%arg0: i32, %arg1: i32) -> (i32, i32, i32) {
    %c0_i32 = arith.constant 0 : i32
    %c0_i32_0 = arith.constant 0 : i32
    %c0_i32_1 = arith.constant 0 : i32
    return %arg0, %c0_i32, %c0_i32_0 : i32, i32, i32
  }
}

</mosaic_0001>

<llo_original>
// kernel: tpu_custom_call.1
$region0: #{tpu_custom_call.1}
  #allocation0 [shape = 'u32[]', space=smem, size = 0x4, offset = 0x4, fixed_abs, tag = 'smem constant byte address 0x4 - core index']
  #allocation1 [shape = 'u32[144,128]{1,0:T(1,128)}', space=vmem, size = 0x12000, scoped, tag = 'internal scratch']
  #allocation2 [shape = 'f32[8,8]{1,0:T(8,128)}', space=vmem, size = 0x1000, scoped, tag = 'scratch operand']
  #allocation3 [shape = 'f32[8,1]{1,0:T(8,128)}', space=vmem, size = 0x1000, scoped, tag = 'scratch operand']
  %s0 = inlined_call_operand.hbm [shape: f32[2,8,256], index: 0, kind: input, shape index: {}]
  %s1 = inlined_call_operand.vmem [shape: f32[2,8], index: 1, kind: input, shape index: {}]
  %s2 = inlined_call_operand.vmem [shape: f32[2,1], index: 2, kind: input, shape index: {}]
  %s3 = inlined_call_operand.vmem [shape: f32[8,2], index: 3, kind: input, shape index: {}]
  %s4 = inlined_call_operand.vmem [shape: f32[8,1], index: 4, kind: input, shape index: {}]
  %s5 = inlined_call_operand.vmem [shape: f32[2,8,1], index: 5, kind: output, shape index: {}]
  %s6 = sld [smem:[#allocation0]]
  $region65: #{tpu_custom_call.1} parent=0
    _
  %s8 = ssub.s32 1, %s6
  %s9 = scalar_select 0, %s8, %s6
  $region1: #{tpu_custom_call.1} parent=0
    #allocation4 [shape = 'u8[16384]{0}', space=vmem, size = 0x4000, scoped, tag = 'input window, operand 0']
    #allocation5 [shape = 's32[2]{0}', space=sflag, size = 0x8, scoped, tag = 'scoped memory for tpu_custom_call.1']
    %10 = vsyncpa [#allocation5], 0
    %s11 = scalar_lea.sflag [#allocation5], 1
    %12 = vsyncpa %s11, 0
    loop: start=0, step=1, limit=4
    $region2: #{tpu_custom_call.1} parent=1 // loop_pre_header
      _
    $region3: #{tpu_custom_call.1} parent=1 // loop_header
      %s14 = sphi 0, %s18
      %p15 = scmp.ge.s32.totalorder %s14, 4
      %s21 = sphi 0, %s33
      %s22 = sphi 0, %s29
      %s23 = sphi 0, %s21
      %s24 = sphi 0, %s22
      %s25 = sphi 0, %s23
      %s26 = sphi 0, %s24
      %s38 = sphi 0, %s40
      %s41 = sphi 0, %s38
      %s42 = sphi 0, %s41
      %s58 = sphi 0, %s42
      %s62 = sphi 0, %s62
      %s64 = sphi 0, %s62
      %s65 = sphi 0, %s64
      %s79 = sphi 0, %s65
      %s83 = sphi 0, %s83
      %s85 = sphi 0, %s83
      %s86 = sphi 0, %s85
      %s100 = sphi 0, %s86
      %s104 = sphi 0, %s104
      %s106 = sphi 0, %s104
      %s107 = sphi 0, %s106
      %s121 = sphi 0, %s107
      %s125 = sphi 0, %s125
      %s127 = sphi 0, %s125
      %s128 = sphi 0, %s127
      %s142 = sphi 0, %s128
      %s148 = sphi 0, %s150
      %s151 = sphi 0, %s148
      %s152 = sphi 0, %s151
      %s168 = sphi 0, %s152
    $region4: #{tpu_custom_call.1} parent=1 // loop_header_branch
      %17 = sbr.rel (%p15) target = $region8
    $region5: #{tpu_custom_call.1} parent=1 // loop_body
      %s19 = ssub.s32 %s14, 1
      %s20 = ssub.s32 %s14, 2
      %s27 = sadd.s32 1, %s22
      %p28 = scmp.ge.s32.totalorder %s27, 1
      %s29 = scalar_select %p28, 0, %s27
      %s30 = sadd.s32 1, %s21
      %s31 = scalar_select %p28, %s30, %s21
      %p32 = scmp.ge.s32.totalorder %s31, 2
      %s33 = scalar_select %p32, 0, %s31
      %s34 = ssub.s32 %s21, %s33
      %s35 = ssub.s32 %s22, %s29
      %s36 = sor.u32 %s34, %s35
      %p37 = scmp.eq.s32.totalorder %s36, 0
      %s39 = sadd.s32 %s38, 1
      %s40 = scalar_select %p37, %s38, %s39
      %p43 = pneg %p37
      %p44 = scmp.eq.s32.totalorder %s14, 1
      %p45 = por %p43, %p44
      %p46 = scmp.ne.s32.totalorder %s38, %s41
      %p47 = scmp.eq.s32.totalorder %s14, 0
      %p48 = por %p46, %p47
      %p49 = scmp.ne.s32.totalorder %s38, %s41
      %p50 = scmp.eq.s32.totalorder %s19, 1
      %p51 = por %p49, %p50
      %p52 = scmp.ne.s32.totalorder %s41, %s42
      %p53 = scmp.eq.s32.totalorder %s19, 0
      %p54 = por %p52, %p53
      %p55 = scmp.ne.s32.totalorder %s41, %s42
      %p56 = scmp.eq.s32.totalorder %s20, 1
      %p57 = por %p55, %p56
      %p59 = scmp.ne.s32.totalorder %s42, %s58
      %p60 = scmp.eq.s32.totalorder %s20, 0
      %p61 = por %p59, %p60
      %s63 = sadd.s32 %s62, 1
      %p66 = scmp.eq.s32.totalorder %s14, 1
      %p67 = scmp.ne.s32.totalorder %s62, %s64
      %p68 = scmp.eq.s32.totalorder %s14, 0
      %p69 = por %p67, %p68
      %p70 = scmp.ne.s32.totalorder %s62, %s64
      %p71 = scmp.eq.s32.totalorder %s19, 1
      %p72 = por %p70, %p71
      %p73 = scmp.ne.s32.totalorder %s64, %s65
      %p74 = scmp.eq.s32.totalorder %s19, 0
      %p75 = por %p73, %p74
      %p76 = scmp.ne.s32.totalorder %s64, %s65
      %p77 = scmp.eq.s32.totalorder %s20, 1
      %p78 = por %p76, %p77
      %p80 = scmp.ne.s32.totalorder %s65, %s79
      %p81 = scmp.eq.s32.totalorder %s20, 0
      %p82 = por %p80, %p81
      %s84 = sadd.s32 %s83, 1
      %p87 = scmp.eq.s32.totalorder %s14, 1
      %p88 = scmp.ne.s32.totalorder %s83, %s85
      %p89 = scmp.eq.s32.totalorder %s14, 0
      %p90 = por %p88, %p89
      %p91 = scmp.ne.s32.totalorder %s83, %s85
      %p92 = scmp.eq.s32.totalorder %s19, 1
      %p93 = por %p91, %p92
      %p94 = scmp.ne.s32.totalorder %s85, %s86
      %p95 = scmp.eq.s32.totalorder %s19, 0
      %p96 = por %p94, %p95
      %p97 = scmp.ne.s32.totalorder %s85, %s86
      %p98 = scmp.eq.s32.totalorder %s20, 1
      %p99 = por %p97, %p98
      %p101 = scmp.ne.s32.totalorder %s86, %s100
      %p102 = scmp.eq.s32.totalorder %s20, 0
      %p103 = por %p101, %p102
      %s105 = sadd.s32 %s104, 1
      %p108 = scmp.eq.s32.totalorder %s14, 1
      %p109 = scmp.ne.s32.totalorder %s104, %s106
      %p110 = scmp.eq.s32.totalorder %s14, 0
      %p111 = por %p109, %p110
      %p112 = scmp.ne.s32.totalorder %s104, %s106
      %p113 = scmp.eq.s32.totalorder %s19, 1
      %p114 = por %p112, %p113
      %p115 = scmp.ne.s32.totalorder %s106, %s107
      %p116 = scmp.eq.s32.totalorder %s19, 0
      %p117 = por %p115, %p116
      %p118 = scmp.ne.s32.totalorder %s106, %s107
      %p119 = scmp.eq.s32.totalorder %s20, 1
      %p120 = por %p118, %p119
      %p122 = scmp.ne.s32.totalorder %s107, %s121
      %p123 = scmp.eq.s32.totalorder %s20, 0
      %p124 = por %p122, %p123
      %s126 = sadd.s32 %s125, 1
      %p129 = scmp.eq.s32.totalorder %s14, 1
      %p130 = scmp.ne.s32.totalorder %s125, %s127
      %p131 = scmp.eq.s32.totalorder %s14, 0
      %p132 = por %p130, %p131
      %p133 = scmp.ne.s32.totalorder %s125, %s127
      %p134 = scmp.eq.s32.totalorder %s19, 1
      %p135 = por %p133, %p134
      %p136 = scmp.ne.s32.totalorder %s127, %s128
      %p137 = scmp.eq.s32.totalorder %s19, 0
      %p138 = por %p136, %p137
      %p139 = scmp.ne.s32.totalorder %s127, %s128
      %p140 = scmp.eq.s32.totalorder %s20, 1
      %p141 = por %p139, %p140
      %p143 = scmp.ne.s32.totalorder %s128, %s142
      %p144 = scmp.eq.s32.totalorder %s20, 0
      %p145 = por %p143, %p144
      %s146 = ssub.s32 %s21, %s33
      %p147 = scmp.eq.s32.totalorder %s146, 0
      %s149 = sadd.s32 %s148, 1
      %s150 = scalar_select %p147, %s148, %s149
      %p153 = pneg %p147
      %p154 = scmp.eq.s32.totalorder %s14, 1
      %p155 = por %p153, %p154
      %p156 = scmp.ne.s32.totalorder %s148, %s151
      %p157 = scmp.eq.s32.totalorder %s14, 0
      %p158 = por %p156, %p157
      %p159 = scmp.ne.s32.totalorder %s148, %s151
      %p160 = scmp.eq.s32.totalorder %s19, 1
      %p161 = por %p159, %p160
      %p162 = scmp.ne.s32.totalorder %s151, %s152
      %p163 = scmp.eq.s32.totalorder %s19, 0
      %p164 = por %p162, %p163
      %p165 = scmp.ne.s32.totalorder %s151, %s152
      %p166 = scmp.eq.s32.totalorder %s20, 1
      %p167 = por %p165, %p166
      %p169 = scmp.ne.s32.totalorder %s152, %s168
      %p170 = scmp.eq.s32.totalorder %s20, 0
      %p171 = por %p169, %p170
      %p172 = scmp.le.s32.totalorder 1, %s14
      %p173 = scmp.lt.s32.totalorder %s14, 3
      %p174 = pnand %p172, %p173
      %p175 = pneg %p174
      // Predicated region
      $region9: #{tpu_custom_call.1} parent=5 // pred_check
        _
      $region10: #{tpu_custom_call.1} parent=5 // pred_check_branch
        %177 = sbr.rel (%p174) target = $region12
      $region11: #{tpu_custom_call.1} parent=5 // pred_region
        %s178 = ssub.s32 %s14, 1
        // Predicated region
        $region13: #{tpu_custom_call.1} parent=11 // pred_check
          %p179 = pneg %p75
        $region14: #{tpu_custom_call.1} parent=11 // pred_check_branch
          %181 = sbr.rel (%p179) target = $region16
        $region15: #{tpu_custom_call.1} parent=11 // pred_region
          _
        $region16: #{tpu_custom_call.1} parent=11 // pred_fallthru
          _
        // Predicated region
        $region17: #{tpu_custom_call.1} parent=11 // pred_check
          %p182 = pneg %p96
        $region18: #{tpu_custom_call.1} parent=11 // pred_check_branch
          %184 = sbr.rel (%p182) target = $region20
        $region19: #{tpu_custom_call.1} parent=11 // pred_region
          _
        $region20: #{tpu_custom_call.1} parent=11 // pred_fallthru
          _
        // Predicated region
        $region21: #{tpu_custom_call.1} parent=11 // pred_check
          %p185 = pneg %p117
        $region22: #{tpu_custom_call.1} parent=11 // pred_check_branch
          %187 = sbr.rel (%p185) target = $region24
        $region23: #{tpu_custom_call.1} parent=11 // pred_region
          _
        $region24: #{tpu_custom_call.1} parent=11 // pred_fallthru
          _
        // Predicated region
        $region25: #{tpu_custom_call.1} parent=11 // pred_check
          %p188 = pneg %p138
        $region26: #{tpu_custom_call.1} parent=11 // pred_check_branch
          %190 = sbr.rel (%p188) target = $region28
        $region27: #{tpu_custom_call.1} parent=11 // pred_region
          _
        $region28: #{tpu_custom_call.1} parent=11 // pred_fallthru
          _
      $region12: #{tpu_custom_call.1} parent=5 // pred_fallthru
        _
      %p191 = scmp.lt.s32.totalorder %s14, 2
      // Predicated region
      $region29: #{tpu_custom_call.1} parent=5 // pred_check
        %p192 = pneg %p191
      $region30: #{tpu_custom_call.1} parent=5 // pred_check_branch
        %194 = sbr.rel (%p192) target = $region32
      $region31: #{tpu_custom_call.1} parent=5 // pred_region
        // Predicated region
        $region33: #{tpu_custom_call.1} parent=31 // pred_check
          %p195 = pneg %p48
        $region34: #{tpu_custom_call.1} parent=31 // pred_check_branch
          %197 = sbr.rel (%p195) target = $region36
        $region35: #{tpu_custom_call.1} parent=31 // pred_region
          %s198 = sand.u32 %s38, 1
          %s199 = scalar_lea.sflag [#allocation5], %s198
          %s200 = sand.u32 %s38, 1
          %s201 = smul.addr %s200, 16
          %s202 = scalar_lea.vmem [#allocation4], %s201
          %s203 = smul.u32 2, %s22
          %s205 = ssub.s32 256, 256
          %206 = vsyncadd %s199, %s205
          %s207 = smul.addr %s21, 2
          %s208 = sadd.s32 %s203, %s207
          %s209 = smul.addr %s208, 128
          %s210 = scalar_lea.hbm %s0, %s209
          %s212 = sshll.u32 %s202, 4
          %s213 = int_to_ptr.vmem [resolvable:$true] %s212
          %215 = dma.hbm_to_vmem [thread:$0]  %s210, 256, %s213, %s199
        $region36: #{tpu_custom_call.1} parent=31 // pred_fallthru
          _
      $region32: #{tpu_custom_call.1} parent=5 // pred_fallthru
        _
      %p216 = scmp.le.s32.totalorder 1, %s14
      %p217 = scmp.lt.s32.totalorder %s14, 3
      %p218 = pnand %p216, %p217
      %p219 = pneg %p218
      // Predicated region
      $region37: #{tpu_custom_call.1} parent=5 // pred_check
        _
      $region38: #{tpu_custom_call.1} parent=5 // pred_check_branch
        %221 = sbr.rel (%p218) target = $region40
      $region39: #{tpu_custom_call.1} parent=5 // pred_region
        %s222 = ssub.s32 %s14, 1
        %s223 = sand.u32 %s41, 1
        %s224 = scalar_lea.sflag [#allocation5], %s223
        %s225 = sand.u32 %s41, 1
        %s226 = smul.addr %s225, 16
        %s227 = scalar_lea.vmem [#allocation4], %s226
        // Predicated region
        $region41: #{tpu_custom_call.1} parent=39 // pred_check
          %p228 = pneg %p54
        $region42: #{tpu_custom_call.1} parent=39 // pred_check_branch
          %230 = sbr.rel (%p228) target = $region44
        $region43: #{tpu_custom_call.1} parent=39 // pred_region
          %231 = dma.done %s224, 256
        $region44: #{tpu_custom_call.1} parent=39 // pred_fallthru
          _
        %s232 = sand.u32 %s41, 1
        %s233 = scalar_lea.sflag [#allocation5], %s232
        %s234 = sand.u32 %s41, 1
        %s235 = smul.addr %s234, 16
        %s236 = scalar_lea.vmem [#allocation4], %s235
        %p237 = pneg %p54
        %p238 = pneg %p51
        %p239 = pneg %p75
        %p240 = pneg %p72
        %p241 = pneg %p96
        %p242 = pneg %p93
        %p243 = pneg %p117
        %p244 = pneg %p114
        %p245 = pneg %p138
        %p246 = pneg %p135
        %p247 = pneg %p164
        %p248 = pneg %p161
        %p249 = scmp.lt.s32.totalorder %s23, 1
        %s250 = scalar_select %p249, %s23, 1
        %s251 = smul.addr %s250, 8
        %s252 = scalar_lea.vmem %s5, %s251
        %s253 = smul.u32 2, %s24
        %p254 = scmp.lt.s32.totalorder %s23, 1
        %s255 = scalar_select %p254, %s23, 1
        %s256 = smul.addr %s255, 8
        %s257 = scalar_lea.vmem %s5, %s256
        %p258 = scmp.eq.s32.totalorder %s24, 0
        // Predicated region
        $region45: #{tpu_custom_call.1} parent=39 // pred_check
          %p259 = pneg %p258
        $region46: #{tpu_custom_call.1} parent=39 // pred_check_branch
          %261 = sbr.rel (%p259) target = $region48
        $region47: #{tpu_custom_call.1} parent=39 // pred_region
          %vm262 = vcmask 64512
          %263 = vst.msk [vmem:[#allocation2] sm:$0xff] %vm262, 0.0
          %vm264 = vcmask 7168
          %265 = vst.msk [vmem:[#allocation3] sm:$0xff] %vm264, 0.0
        $region48: #{tpu_custom_call.1} parent=39 // pred_fallthru
          _
        %v266 = vld [vmem:[%s227] sm:$0xff]
        %v267 = vld [vmem:[%s227 + $0x8] sm:$0xff]
        %v268 = vld [vmem:[#allocation2] sm:$0xff]
        %269 = vmatprep.subr.mxu0 %v267
        %270 = vmatpush1.xpose.msra.mxu0 %v266
        %271 = vmatprep.subr.mxu0 0.0
        %272 = vmatpush1.xpose.msra.mxu0 0.0
        %273 = vmatprep.subr.mxu0 0.0
        %274 = vmatpush1.xpose.msra.mxu0 0.0
        %275 = vmatprep.subr.mxu0 0.0
        %276 = vmatpush1.xpose.msra.mxu0 0.0
        %277 = vmatprep.subr.mxu0 0.0
        %278 = vmatpush1.xpose.msra.mxu0 0.0
        %279 = vmatprep.subr.mxu0 0.0
        %280 = vmatpush1.xpose.msra.mxu0 0.0
        %281 = vmatprep.subr.mxu0 0.0
        %282 = vmatpush1.xpose.msra.mxu0 0.0
        %283 = vmatprep.subr.mxu0 0.0
        %284 = vmatpush1.xpose.msra.mxu0 0.0
        %285 = vmatprep.subr.mxu0 0.0
        %286 = vmatpush1.xpose.msra.mxu0 0.0
        %287 = vmatprep.subr.mxu0 0.0
        %288 = vmatpush1.xpose.msra.mxu0 0.0
        %289 = vmatprep.subr.mxu0 0.0
        %290 = vmatpush1.xpose.msra.mxu0 0.0
        %291 = vmatprep.subr.mxu0 0.0
        %292 = vmatpush1.xpose.msra.mxu0 0.0
        %293 = vmatprep.subr.mxu0 0.0
        %294 = vmatpush1.xpose.msra.mxu0 0.0
        %295 = vmatprep.subr.mxu0 0.0
        %296 = vmatpush1.xpose.msra.mxu0 0.0
        %297 = vmatprep.subr.mxu0 0.0
        %298 = vmatpush1.xpose.msra.mxu0 0.0
        %299 = vmatprep.subr.mxu0 0.0
        %300 = vmatpush1.xpose.msra.mxu0 0.0
        %301 = vmatprep.subr.mxu0 0.0
        %302 = vmatpush1.xpose.msra.mxu0 0.0
        %303 = vmatprep.subr.mxu0 0.0
        %304 = vmatpush1.xpose.msra.mxu0 0.0
        %305 = vmatprep.subr.mxu0 0.0
        %306 = vmatpush1.xpose.msra.mxu0 0.0
        %307 = vmatprep.subr.mxu0 0.0
        %308 = vmatpush1.xpose.msra.mxu0 0.0
        %309 = vmatprep.subr.mxu0 0.0
        %310 = vmatpush1.xpose.msra.mxu0 0.0
        %311 = vmatprep.subr.mxu0 0.0
        %312 = vmatpush1.xpose.msra.mxu0 0.0
        %313 = vmatprep.subr.mxu0 0.0
        %314 = vmatpush1.xpose.msra.mxu0 0.0
        %315 = vmatprep.subr.mxu0 0.0
        %316 = vmatpush1.xpose.msra.mxu0 0.0
        %317 = vmatprep.subr.mxu0 0.0
        %318 = vmatpush1.xpose.msra.mxu0 0.0
        %319 = vmatprep.subr.mxu0 0.0
        %320 = vmatpush1.xpose.msra.mxu0 0.0
        %321 = vmatprep.subr.mxu0 0.0
        %322 = vmatpush1.xpose.msra.mxu0 0.0
        %323 = vmatprep.subr.mxu0 0.0
        %324 = vmatpush1.xpose.msra.mxu0 0.0
        %325 = vmatprep.subr.mxu0 0.0
        %326 = vmatpush1.xpose.msra.mxu0 0.0
        %327 = vmatprep.subr.mxu0 0.0
        %328 = vmatpush1.xpose.msra.mxu0 0.0
        %329 = vmatprep.subr.mxu0 0.0
        %330 = vmatpush1.xpose.msra.mxu0 0.0
        %331 = vmatprep.subr.mxu0 0.0
        %332 = vmatpush1.xpose.msra.mxu0 0.0
        %333 = vmatprep.mubr.f32.mxu0 %v267
        %334 = vmatmul.mubr.f32.gmra.mrb[0].mxu0 %v266
        %v335 = vpop.f32.mrb[0].mxu0
        %v336 = vadd.f32 0.0, %v335
        %v337 = vpop.f32.mrb[0].mxu0
        %338 = vdwg.mxu0
        %v339 = vadd.f32 %v268, %v336
        %vm340 = vcmask 64512
        %341 = vst.msk [vmem:[#allocation2] sm:$0xff] %vm340, %v339
        %v342 = vld [vmem:[#allocation3] sm:$0xff]
        %v343 = vadd.f32 %v266, %v267
        %344 = vadd.xlane.f32.xlu0 %v343
        %v345 = vpop.xlane.xlu0 %344
        %v346 = vadd.f32 %v342, %v345
        %vm347 = vcmask 7168
        %348 = vst.msk [vmem:[#allocation3] sm:$0xff] %vm347, %v346
        // Predicated region
        $region49: #{tpu_custom_call.1} parent=39 // pred_check
          %p349 = pneg %p258
        $region50: #{tpu_custom_call.1} parent=39 // pred_check_branch
          %351 = sbr.rel (%p349) target = $region52
        $region51: #{tpu_custom_call.1} parent=39 // pred_region
          %v352 = vld [vmem:[#allocation3] sm:$0xff]
          %v353 = vmul.f32 %v352, 0.00390625
          %v354 = vld [vmem:[#allocation2] sm:$0xff]
          %v355 = vmul.f32 %v354, 0.00390625
          %v357 = vsel %vm347, %v353, 0
          %359 = vmatprep.subr.mxu0 0.0
          %360 = vmatpush1.xpose.msra.mxu0 %v357
          %361 = vmatprep.subr.mxu0 0.0
          %362 = vmatpush1.xpose.msra.mxu0 0.0
          %363 = vmatprep.subr.mxu0 0.0
          %364 = vmatpush1.xpose.msra.mxu0 0.0
          %365 = vmatprep.subr.mxu0 0.0
          %366 = vmatpush1.xpose.msra.mxu0 0.0
          %367 = vmatprep.subr.mxu0 0.0
          %368 = vmatpush1.xpose.msra.mxu0 0.0
          %369 = vmatprep.subr.mxu0 0.0
          %370 = vmatpush1.xpose.msra.mxu0 0.0
          %371 = vmatprep.subr.mxu0 0.0
          %372 = vmatpush1.xpose.msra.mxu0 0.0
          %373 = vmatprep.subr.mxu0 0.0
          %374 = vmatpush1.xpose.msra.mxu0 0.0
          %375 = vmatprep.subr.mxu0 0.0
          %376 = vmatpush1.xpose.msra.mxu0 0.0
          %377 = vmatprep.subr.mxu0 0.0
          %378 = vmatpush1.xpose.msra.mxu0 0.0
          %379 = vmatprep.subr.mxu0 0.0
          %380 = vmatpush1.xpose.msra.mxu0 0.0
          %381 = vmatprep.subr.mxu0 0.0
          %382 = vmatpush1.xpose.msra.mxu0 0.0
          %383 = vmatprep.subr.mxu0 0.0
          %384 = vmatpush1.xpose.msra.mxu0 0.0
          %385 = vmatprep.subr.mxu0 0.0
          %386 = vmatpush1.xpose.msra.mxu0 0.0
          %387 = vmatprep.subr.mxu0 0.0
          %388 = vmatpush1.xpose.msra.mxu0 0.0
          %389 = vmatprep.subr.mxu0 0.0
          %390 = vmatpush1.xpose.msra.mxu0 0.0
          %391 = vmatprep.subr.mxu0 0.0
          %392 = vmatpush1.xpose.msra.mxu0 0.0
          %393 = vmatprep.subr.mxu0 0.0
          %394 = vmatpush1.xpose.msra.mxu0 0.0
          %395 = vmatprep.subr.mxu0 0.0
          %396 = vmatpush1.xpose.msra.mxu0 0.0
          %397 = vmatprep.subr.mxu0 0.0
          %398 = vmatpush1.xpose.msra.mxu0 0.0
          %399 = vmatprep.subr.mxu0 0.0
          %400 = vmatpush1.xpose.msra.mxu0 0.0
          %401 = vmatprep.subr.mxu0 0.0
          %402 = vmatpush1.xpose.msra.mxu0 0.0
          %403 = vmatprep.subr.mxu0 0.0
          %404 = vmatpush1.xpose.msra.mxu0 0.0
          %405 = vmatprep.subr.mxu0 0.0
          %406 = vmatpush1.xpose.msra.mxu0 0.0
          %407 = vmatprep.subr.mxu0 0.0
          %408 = vmatpush1.xpose.msra.mxu0 0.0
          %409 = vmatprep.subr.mxu0 0.0
          %410 = vmatpush1.xpose.msra.mxu0 0.0
          %411 = vmatprep.subr.mxu0 0.0
          %412 = vmatpush1.xpose.msra.mxu0 0.0
          %413 = vmatprep.subr.mxu0 0.0
          %414 = vmatpush1.xpose.msra.mxu0 0.0
          %415 = vmatprep.subr.mxu0 0.0
          %416 = vmatpush1.xpose.msra.mxu0 0.0
          %417 = vmatprep.subr.mxu0 0.0
          %418 = vmatpush1.xpose.msra.mxu0 0.0
          %419 = vmatprep.subr.mxu0 0.0
          %420 = vmatpush1.xpose.msra.mxu0 0.0
          %421 = vmatprep.subr.mxu0 0.0
          %422 = vmatpush1.xpose.msra.mxu0 0.0
          %423 = vmatprep.mubr.f32.mxu0 0.0
          %424 = vmatmul.mubr.f32.gmra.mrb[0].mxu0 %v357
          %v425 = vpop.f32.mrb[0].mxu0
          %v426 = vadd.f32 0.0, %v425
          %v427 = vpop.f32.mrb[0].mxu0
          %428 = vdwg.mxu0
          %v429 = vsub.f32 %v355, %v426
          %v430 = vlaneseq
          %v431 = vshrl.u32 %v430, 7
          %v432 = vlaneseq
          %v433 = vand.u32 %v432, 127
          %vm434 = vcmp.eq.s32.totalorder %v431, %v433
          %v435 = vsel %vm434, 1, 0
          %v436 = vcvt.s32.f32 %v435
          %v437 = vmul.f32 %v436, 3.0
          %v438 = vmul.f32 %v429, %v436
          %v439 = vsel %vm340, %v438, 0.0
          %440 = vadd.xlane.f32.xlu0 %v439
          %v441 = vpop.xlane.xlu0 %440
          %v442 = vrot.slane %v441, 4
          %v443 = vadd.f32 %v441, %v442
          %v444 = vrot.slane %v443, 2
          %v445 = vadd.f32 %v443, %v444
          %v446 = vrot.slane %v445, 1
          %v447 = vadd.f32 %v445, %v446
          %s448 = vtos %v447
          %v449 = vstv %s448
          %v450 = vrcp.pop %v449
          %v451 = vmul.f32 %v429, %v450
          %v452 = vsub.f32 %v437, %v451
          %v453 = vmul.f32 %v452, 0.5
          %v455 = vsel %vm340, %v451, 0
          %457 = vmatprep.subr.mxu0 0.0
          %458 = vmatpush1.msra.mxu0 %v453
          %459 = vmatprep.subr.mxu0 0.0
          %460 = vmatpush1.msra.mxu0 0.0
          %461 = vmatprep.subr.mxu0 0.0
          %462 = vmatpush1.msra.mxu0 0.0
          %463 = vmatprep.subr.mxu0 0.0
          %464 = vmatpush1.msra.mxu0 0.0
          %465 = vmatprep.subr.mxu0 0.0
          %466 = vmatpush1.msra.mxu0 0.0
          %467 = vmatprep.subr.mxu0 0.0
          %468 = vmatpush1.msra.mxu0 0.0
          %469 = vmatprep.subr.mxu0 0.0
          %470 = vmatpush1.msra.mxu0 0.0
          %471 = vmatprep.subr.mxu0 0.0
          %472 = vmatpush1.msra.mxu0 0.0
          %473 = vmatprep.subr.mxu0 0.0
          %474 = vmatpush1.msra.mxu0 0.0
          %475 = vmatprep.subr.mxu0 0.0
          %476 = vmatpush1.msra.mxu0 0.0
          %477 = vmatprep.subr.mxu0 0.0
          %478 = vmatpush1.msra.mxu0 0.0
          %479 = vmatprep.subr.mxu0 0.0
          %480 = vmatpush1.msra.mxu0 0.0
          %481 = vmatprep.subr.mxu0 0.0
          %482 = vmatpush1.msra.mxu0 0.0
          %483 = vmatprep.subr.mxu0 0.0
          %484 = vmatpush1.msra.mxu0 0.0
          %485 = vmatprep.subr.mxu0 0.0
          %486 = vmatpush1.msra.mxu0 0.0
          %487 = vmatprep.subr.mxu0 0.0
          %488 = vmatpush1.msra.mxu0 0.0
          %489 = vmatprep.subr.mxu0 0.0
          %490 = vmatpush1.msra.mxu0 0.0
          %491 = vmatprep.subr.mxu0 0.0
          %492 = vmatpush1.msra.mxu0 0.0
          %493 = vmatprep.subr.mxu0 0.0
          %494 = vmatpush1.msra.mxu0 0.0
          %495 = vmatprep.subr.mxu0 0.0
          %496 = vmatpush1.msra.mxu0 0.0
          %497 = vmatprep.subr.mxu0 0.0
          %498 = vmatpush1.msra.mxu0 0.0
          %499 = vmatprep.subr.mxu0 0.0
          %500 = vmatpush1.msra.mxu0 0.0
          %501 = vmatprep.subr.mxu0 0.0
          %502 = vmatpush1.msra.mxu0 0.0
          %503 = vmatprep.subr.mxu0 0.0
          %504 = vmatpush1.msra.mxu0 0.0
          %505 = vmatprep.subr.mxu0 0.0
          %506 = vmatpush1.msra.mxu0 0.0
          %507 = vmatprep.subr.mxu0 0.0
          %508 = vmatpush1.msra.mxu0 0.0
          %509 = vmatprep.subr.mxu0 0.0
          %510 = vmatpush1.msra.mxu0 0.0
          %511 = vmatprep.subr.mxu0 0.0
          %512 = vmatpush1.msra.mxu0 0.0
          %513 = vmatprep.subr.mxu0 0.0
          %514 = vmatpush1.msra.mxu0 0.0
          %515 = vmatprep.subr.mxu0 0.0
          %516 = vmatpush1.msra.mxu0 0.0
          %517 = vmatprep.subr.mxu0 0.0
          %518 = vmatpush1.msra.mxu0 0.0
          %519 = vmatprep.subr.mxu0 0.0
          %520 = vmatpush1.msra.mxu0 0.0
          %521 = vmatprep.mubr.f32.mxu0 0.0
          %522 = vmatmul.mubr.f32.gmra.mrb[0].mxu0 %v455
          %v523 = vpop.f32.mrb[0].mxu0
          %v524 = vadd.f32 0.0, %v523
          %v525 = vpop.f32.mrb[0].mxu0
          %526 = vdwg.mxu0
          %v528 = vsel %vm340, %v453, 0
          %530 = vmatprep.subr.mxu0 0.0
          %531 = vmatpush1.msra.mxu0 %v524
          %532 = vmatprep.subr.mxu0 0.0
          %533 = vmatpush1.msra.mxu0 0.0
          %534 = vmatprep.subr.mxu0 0.0
          %535 = vmatpush1.msra.mxu0 0.0
          %536 = vmatprep.subr.mxu0 0.0
          %537 = vmatpush1.msra.mxu0 0.0
          %538 = vmatprep.subr.mxu0 0.0
          %539 = vmatpush1.msra.mxu0 0.0
          %540 = vmatprep.subr.mxu0 0.0
          %541 = vmatpush1.msra.mxu0 0.0
          %542 = vmatprep.subr.mxu0 0.0
          %543 = vmatpush1.msra.mxu0 0.0
          %544 = vmatprep.subr.mxu0 0.0
          %545 = vmatpush1.msra.mxu0 0.0
          %546 = vmatprep.subr.mxu0 0.0
          %547 = vmatpush1.msra.mxu0 0.0
          %548 = vmatprep.subr.mxu0 0.0
          %549 = vmatpush1.msra.mxu0 0.0
          %550 = vmatprep.subr.mxu0 0.0
          %551 = vmatpush1.msra.mxu0 0.0
          %552 = vmatprep.subr.mxu0 0.0
          %553 = vmatpush1.msra.mxu0 0.0
          %554 = vmatprep.subr.mxu0 0.0
          %555 = vmatpush1.msra.mxu0 0.0
          %556 = vmatprep.subr.mxu0 0.0
          %557 = vmatpush1.msra.mxu0 0.0
          %558 = vmatprep.subr.mxu0 0.0
          %559 = vmatpush1.msra.mxu0 0.0
          %560 = vmatprep.subr.mxu0 0.0
          %561 = vmatpush1.msra.mxu0 0.0
          %562 = vmatprep.subr.mxu0 0.0
          %563 = vmatpush1.msra.mxu0 0.0
          %564 = vmatprep.subr.mxu0 0.0
          %565 = vmatpush1.msra.mxu0 0.0
          %566 = vmatprep.subr.mxu0 0.0
          %567 = vmatpush1.msra.mxu0 0.0
          %568 = vmatprep.subr.mxu0 0.0
          %569 = vmatpush1.msra.mxu0 0.0
          %570 = vmatprep.subr.mxu0 0.0
          %571 = vmatpush1.msra.mxu0 0.0
          %572 = vmatprep.subr.mxu0 0.0
          %573 = vmatpush1.msra.mxu0 0.0
          %574 = vmatprep.subr.mxu0 0.0
          %575 = vmatpush1.msra.mxu0 0.0
          %576 = vmatprep.subr.mxu0 0.0
          %577 = vmatpush1.msra.mxu0 0.0
          %578 = vmatprep.subr.mxu0 0.0
          %579 = vmatpush1.msra.mxu0 0.0
          %580 = vmatprep.subr.mxu0 0.0
          %581 = vmatpush1.msra.mxu0 0.0
          %582 = vmatprep.subr.mxu0 0.0
          %583 = vmatpush1.msra.mxu0 0.0
          %584 = vmatprep.subr.mxu0 0.0
          %585 = vmatpush1.msra.mxu0 0.0
          %586 = vmatprep.subr.mxu0 0.0
          %587 = vmatpush1.msra.mxu0 0.0
          %588 = vmatprep.subr.mxu0 0.0
          %589 = vmatpush1.msra.mxu0 0.0
          %590 = vmatprep.subr.mxu0 0.0
          %591 = vmatpush1.msra.mxu0 0.0
          %592 = vmatprep.subr.mxu0 0.0
          %593 = vmatpush1.msra.mxu0 0.0
          %594 = vmatprep.mubr.f32.mxu0 0.0
          %595 = vmatmul.mubr.f32.gmra.mrb[0].mxu0 %v528
          %v596 = vpop.f32.mrb[0].mxu0
          %v597 = vadd.f32 0.0, %v596
          %v598 = vpop.f32.mrb[0].mxu0
          %599 = vdwg.mxu0
          %v600 = vsub.f32 %v437, %v597
          %v601 = vmul.f32 %v600, 0.5
          %v603 = vsel %vm340, %v524, 0
          %605 = vmatprep.subr.mxu0 0.0
          %606 = vmatpush1.msra.mxu0 %v601
          %607 = vmatprep.subr.mxu0 0.0
          %608 = vmatpush1.msra.mxu0 0.0
          %609 = vmatprep.subr.mxu0 0.0
          %610 = vmatpush1.msra.mxu0 0.0
          %611 = vmatprep.subr.mxu0 0.0
          %612 = vmatpush1.msra.mxu0 0.0
          %613 = vmatprep.subr.mxu0 0.0
          %614 = vmatpush1.msra.mxu0 0.0
          %615 = vmatprep.subr.mxu0 0.0
          %616 = vmatpush1.msra.mxu0 0.0
          %617 = vmatprep.subr.mxu0 0.0
          %618 = vmatpush1.msra.mxu0 0.0
          %619 = vmatprep.subr.mxu0 0.0
          %620 = vmatpush1.msra.mxu0 0.0
          %621 = vmatprep.subr.mxu0 0.0
          %622 = vmatpush1.msra.mxu0 0.0
          %623 = vmatprep.subr.mxu0 0.0
          %624 = vmatpush1.msra.mxu0 0.0
          %625 = vmatprep.subr.mxu0 0.0
          %626 = vmatpush1.msra.mxu0 0.0
          %627 = vmatprep.subr.mxu0 0.0
          %628 = vmatpush1.msra.mxu0 0.0
          %629 = vmatprep.subr.mxu0 0.0
          %630 = vmatpush1.msra.mxu0 0.0
          %631 = vmatprep.subr.mxu0 0.0
          %632 = vmatpush1.msra.mxu0 0.0
          %633 = vmatprep.subr.mxu0 0.0
          %634 = vmatpush1.msra.mxu0 0.0
          %635 = vmatprep.subr.mxu0 0.0
          %636 = vmatpush1.msra.mxu0 0.0
          %637 = vmatprep.subr.mxu0 0.0
          %638 = vmatpush1.msra.mxu0 0.0
          %639 = vmatprep.subr.mxu0 0.0
          %640 = vmatpush1.msra.mxu0 0.0
          %641 = vmatprep.subr.mxu0 0.0
          %642 = vmatpush1.msra.mxu0 0.0
          %643 = vmatprep.subr.mxu0 0.0
          %644 = vmatpush1.msra.mxu0 0.0
          %645 = vmatprep.subr.mxu0 0.0
          %646 = vmatpush1.msra.mxu0 0.0
          %647 = vmatprep.subr.mxu0 0.0
          %648 = vmatpush1.msra.mxu0 0.0
          %649 = vmatprep.subr.mxu0 0.0
          %650 = vmatpush1.msra.mxu0 0.0
          %651 = vmatprep.subr.mxu0 0.0
          %652 = vmatpush1.msra.mxu0 0.0
          %653 = vmatprep.subr.mxu0 0.0
          %654 = vmatpush1.msra.mxu0 0.0
          %655 = vmatprep.subr.mxu0 0.0
          %656 = vmatpush1.msra.mxu0 0.0
          %657 = vmatprep.subr.mxu0 0.0
          %658 = vmatpush1.msra.mxu0 0.0
          %659 = vmatprep.subr.mxu0 0.0
          %660 = vmatpush1.msra.mxu0 0.0
          %661 = vmatprep.subr.mxu0 0.0
          %662 = vmatpush1.msra.mxu0 0.0
          %663 = vmatprep.subr.mxu0 0.0
          %664 = vmatpush1.msra.mxu0 0.0
          %665 = vmatprep.subr.mxu0 0.0
          %666 = vmatpush1.msra.mxu0 0.0
          %667 = vmatprep.subr.mxu0 0.0
          %668 = vmatpush1.msra.mxu0 0.0
          %669 = vmatprep.mubr.f32.mxu0 0.0
          %670 = vmatmul.mubr.f32.gmra.mrb[0].mxu0 %v603
          %v671 = vpop.f32.mrb[0].mxu0
          %v672 = vadd.f32 0.0, %v671
          %v673 = vpop.f32.mrb[0].mxu0
          %674 = vdwg.mxu0
          %v676 = vsel %vm340, %v601, 0
          %678 = vmatprep.subr.mxu0 0.0
          %679 = vmatpush1.msra.mxu0 %v453
          %680 = vmatprep.subr.mxu0 0.0
          %681 = vmatpush1.msra.mxu0 0.0
          %682 = vmatprep.subr.mxu0 0.0
          %683 = vmatpush1.msra.mxu0 0.0
          %684 = vmatprep.subr.mxu0 0.0
          %685 = vmatpush1.msra.mxu0 0.0
          %686 = vmatprep.subr.mxu0 0.0
          %687 = vmatpush1.msra.mxu0 0.0
          %688 = vmatprep.subr.mxu0 0.0
          %689 = vmatpush1.msra.mxu0 0.0
          %690 = vmatprep.subr.mxu0 0.0
          %691 = vmatpush1.msra.mxu0 0.0
          %692 = vmatprep.subr.mxu0 0.0
          %693 = vmatpush1.msra.mxu0 0.0
          %694 = vmatprep.subr.mxu0 0.0
          %695 = vmatpush1.msra.mxu0 0.0
          %696 = vmatprep.subr.mxu0 0.0
          %697 = vmatpush1.msra.mxu0 0.0
          %698 = vmatprep.subr.mxu0 0.0
          %699 = vmatpush1.msra.mxu0 0.0
          %700 = vmatprep.subr.mxu0 0.0
          %701 = vmatpush1.msra.mxu0 0.0
          %702 = vmatprep.subr.mxu0 0.0
          %703 = vmatpush1.msra.mxu0 0.0
          %704 = vmatprep.subr.mxu0 0.0
          %705 = vmatpush1.msra.mxu0 0.0
          %706 = vmatprep.subr.mxu0 0.0
          %707 = vmatpush1.msra.mxu0 0.0
          %708 = vmatprep.subr.mxu0 0.0
          %709 = vmatpush1.msra.mxu0 0.0
          %710 = vmatprep.subr.mxu0 0.0
          %711 = vmatpush1.msra.mxu0 0.0
          %712 = vmatprep.subr.mxu0 0.0
          %713 = vmatpush1.msra.mxu0 0.0
          %714 = vmatprep.subr.mxu0 0.0
          %715 = vmatpush1.msra.mxu0 0.0
          %716 = vmatprep.subr.mxu0 0.0
          %717 = vmatpush1.msra.mxu0 0.0
          %718 = vmatprep.subr.mxu0 0.0
          %719 = vmatpush1.msra.mxu0 0.0
          %720 = vmatprep.subr.mxu0 0.0
          %721 = vmatpush1.msra.mxu0 0.0
          %722 = vmatprep.subr.mxu0 0.0
          %723 = vmatpush1.msra.mxu0 0.0
          %724 = vmatprep.subr.mxu0 0.0
          %725 = vmatpush1.msra.mxu0 0.0
          %726 = vmatprep.subr.mxu0 0.0
          %727 = vmatpush1.msra.mxu0 0.0
          %728 = vmatprep.subr.mxu0 0.0
          %729 = vmatpush1.msra.mxu0 0.0
          %730 = vmatprep.subr.mxu0 0.0
          %731 = vmatpush1.msra.mxu0 0.0
          %732 = vmatprep.subr.mxu0 0.0
          %733 = vmatpush1.msra.mxu0 0.0
          %734 = vmatprep.subr.mxu0 0.0
          %735 = vmatpush1.msra.mxu0 0.0
          %736 = vmatprep.subr.mxu0 0.0
          %737 = vmatpush1.msra.mxu0 0.0
          %738 = vmatprep.subr.mxu0 0.0
          %739 = vmatpush1.msra.mxu0 0.0
          %740 = vmatprep.subr.mxu0 0.0
          %741 = vmatpush1.msra.mxu0 0.0
          %742 = vmatprep.mubr.f32.mxu0 0.0
          %743 = vmatmul.mubr.f32.gmra.mrb[0].mxu0 %v676
          %v744 = vpop.f32.mrb[0].mxu0
          %v745 = vadd.f32 0.0, %v744
          %v746 = vpop.f32.mrb[0].mxu0
          %747 = vdwg.mxu0
          %v749 = vsel %vm340, %v745, 0
          %751 = vmatprep.subr.mxu0 0.0
          %752 = vmatpush1.msra.mxu0 %v672
          %753 = vmatprep.subr.mxu0 0.0
          %754 = vmatpush1.msra.mxu0 0.0
          %755 = vmatprep.subr.mxu0 0.0
          %756 = vmatpush1.msra.mxu0 0.0
          %757 = vmatprep.subr.mxu0 0.0
          %758 = vmatpush1.msra.mxu0 0.0
          %759 = vmatprep.subr.mxu0 0.0
          %760 = vmatpush1.msra.mxu0 0.0
          %761 = vmatprep.subr.mxu0 0.0
          %762 = vmatpush1.msra.mxu0 0.0
          %763 = vmatprep.subr.mxu0 0.0
          %764 = vmatpush1.msra.mxu0 0.0
          %765 = vmatprep.subr.mxu0 0.0
          %766 = vmatpush1.msra.mxu0 0.0
          %767 = vmatprep.subr.mxu0 0.0
          %768 = vmatpush1.msra.mxu0 0.0
          %769 = vmatprep.subr.mxu0 0.0
          %770 = vmatpush1.msra.mxu0 0.0
          %771 = vmatprep.subr.mxu0 0.0
          %772 = vmatpush1.msra.mxu0 0.0
          %773 = vmatprep.subr.mxu0 0.0
          %774 = vmatpush1.msra.mxu0 0.0
          %775 = vmatprep.subr.mxu0 0.0
          %776 = vmatpush1.msra.mxu0 0.0
          %777 = vmatprep.subr.mxu0 0.0
          %778 = vmatpush1.msra.mxu0 0.0
          %779 = vmatprep.subr.mxu0 0.0
          %780 = vmatpush1.msra.mxu0 0.0
          %781 = vmatprep.subr.mxu0 0.0
          %782 = vmatpush1.msra.mxu0 0.0
          %783 = vmatprep.subr.mxu0 0.0
          %784 = vmatpush1.msra.mxu0 0.0
          %785 = vmatprep.subr.mxu0 0.0
          %786 = vmatpush1.msra.mxu0 0.0
          %787 = vmatprep.subr.mxu0 0.0
          %788 = vmatpush1.msra.mxu0 0.0
          %789 = vmatprep.subr.mxu0 0.0
          %790 = vmatpush1.msra.mxu0 0.0
          %791 = vmatprep.subr.mxu0 0.0
          %792 = vmatpush1.msra.mxu0 0.0
          %793 = vmatprep.subr.mxu0 0.0
          %794 = vmatpush1.msra.mxu0 0.0
          %795 = vmatprep.subr.mxu0 0.0
          %796 = vmatpush1.msra.mxu0 0.0
          %797 = vmatprep.subr.mxu0 0.0
          %798 = vmatpush1.msra.mxu0 0.0
          %799 = vmatprep.subr.mxu0 0.0
          %800 = vmatpush1.msra.mxu0 0.0
          %801 = vmatprep.subr.mxu0 0.0
          %802 = vmatpush1.msra.mxu0 0.0
          %803 = vmatprep.subr.mxu0 0.0
          %804 = vmatpush1.msra.mxu0 0.0
          %805 = vmatprep.subr.mxu0 0.0
          %806 = vmatpush1.msra.mxu0 0.0
          %807 = vmatprep.subr.mxu0 0.0
          %808 = vmatpush1.msra.mxu0 0.0
          %809 = vmatprep.subr.mxu0 0.0
          %810 = vmatpush1.msra.mxu0 0.0
          %811 = vmatprep.subr.mxu0 0.0
          %812 = vmatpush1.msra.mxu0 0.0
          %813 = vmatprep.subr.mxu0 0.0
          %814 = vmatpush1.msra.mxu0 0.0
          %815 = vmatprep.mubr.f32.mxu0 0.0
          %816 = vmatmul.mubr.f32.gmra.mrb[0].mxu0 %v749
          %v817 = vpop.f32.mrb[0].mxu0
          %v818 = vadd.f32 0.0, %v817
          %v819 = vpop.f32.mrb[0].mxu0
          %820 = vdwg.mxu0
          %v821 = vsub.f32 %v437, %v818
          %v822 = vmul.f32 %v821, 0.5
          %v824 = vsel %vm340, %v672, 0
          %826 = vmatprep.subr.mxu0 0.0
          %827 = vmatpush1.msra.mxu0 %v822
          %828 = vmatprep.subr.mxu0 0.0
          %829 = vmatpush1.msra.mxu0 0.0
          %830 = vmatprep.subr.mxu0 0.0
          %831 = vmatpush1.msra.mxu0 0.0
          %832 = vmatprep.subr.mxu0 0.0
          %833 = vmatpush1.msra.mxu0 0.0
          %834 = vmatprep.subr.mxu0 0.0
          %835 = vmatpush1.msra.mxu0 0.0
          %836 = vmatprep.subr.mxu0 0.0
          %837 = vmatpush1.msra.mxu0 0.0
          %838 = vmatprep.subr.mxu0 0.0
          %839 = vmatpush1.msra.mxu0 0.0
          %840 = vmatprep.subr.mxu0 0.0
          %841 = vmatpush1.msra.mxu0 0.0
          %842 = vmatprep.subr.mxu0 0.0
          %843 = vmatpush1.msra.mxu0 0.0
          %844 = vmatprep.subr.mxu0 0.0
          %845 = vmatpush1.msra.mxu0 0.0
          %846 = vmatprep.subr.mxu0 0.0
          %847 = vmatpush1.msra.mxu0 0.0
          %848 = vmatprep.subr.mxu0 0.0
          %849 = vmatpush1.msra.mxu0 0.0
          %850 = vmatprep.subr.mxu0 0.0
          %851 = vmatpush1.msra.mxu0 0.0
          %852 = vmatprep.subr.mxu0 0.0
          %853 = vmatpush1.msra.mxu0 0.0
          %854 = vmatprep.subr.mxu0 0.0
          %855 = vmatpush1.msra.mxu0 0.0
          %856 = vmatprep.subr.mxu0 0.0
          %857 = vmatpush1.msra.mxu0 0.0
          %858 = vmatprep.subr.mxu0 0.0
          %859 = vmatpush1.msra.mxu0 0.0
          %860 = vmatprep.subr.mxu0 0.0
          %861 = vmatpush1.msra.mxu0 0.0
          %862 = vmatprep.subr.mxu0 0.0
          %863 = vmatpush1.msra.mxu0 0.0
          %864 = vmatprep.subr.mxu0 0.0
          %865 = vmatpush1.msra.mxu0 0.0
          %866 = vmatprep.subr.mxu0 0.0
          %867 = vmatpush1.msra.mxu0 0.0
          %868 = vmatprep.subr.mxu0 0.0
          %869 = vmatpush1.msra.mxu0 0.0
          %870 = vmatprep.subr.mxu0 0.0
          %871 = vmatpush1.msra.mxu0 0.0
          %872 = vmatprep.subr.mxu0 0.0
          %873 = vmatpush1.msra.mxu0 0.0
          %874 = vmatprep.subr.mxu0 0.0
          %875 = vmatpush1.msra.mxu0 0.0
          %876 = vmatprep.subr.mxu0 0.0
          %877 = vmatpush1.msra.mxu0 0.0
          %878 = vmatprep.subr.mxu0 0.0
          %879 = vmatpush1.msra.mxu0 0.0
          %880 = vmatprep.subr.mxu0 0.0
          %881 = vmatpush1.msra.mxu0 0.0
          %882 = vmatprep.subr.mxu0 0.0
          %883 = vmatpush1.msra.mxu0 0.0
          %884 = vmatprep.subr.mxu0 0.0
          %885 = vmatpush1.msra.mxu0 0.0
          %886 = vmatprep.subr.mxu0 0.0
          %887 = vmatpush1.msra.mxu0 0.0
          %888 = vmatprep.subr.mxu0 0.0
          %889 = vmatpush1.msra.mxu0 0.0
          %890 = vmatprep.mubr.f32.mxu0 0.0
          %891 = vmatmul.mubr.f32.gmra.mrb[0].mxu0 %v824
          %v892 = vpop.f32.mrb[0].mxu0
          %v893 = vadd.f32 0.0, %v892
          %v894 = vpop.f32.mrb[0].mxu0
          %895 = vdwg.mxu0
          %v897 = vsel %vm340, %v822, 0
          %899 = vmatprep.subr.mxu0 0.0
          %900 = vmatpush1.msra.mxu0 %v745
          %901 = vmatprep.subr.mxu0 0.0
          %902 = vmatpush1.msra.mxu0 0.0
          %903 = vmatprep.subr.mxu0 0.0
          %904 = vmatpush1.msra.mxu0 0.0
          %905 = vmatprep.subr.mxu0 0.0
          %906 = vmatpush1.msra.mxu0 0.0
          %907 = vmatprep.subr.mxu0 0.0
          %908 = vmatpush1.msra.mxu0 0.0
          %909 = vmatprep.subr.mxu0 0.0
          %910 = vmatpush1.msra.mxu0 0.0
          %911 = vmatprep.subr.mxu0 0.0
          %912 = vmatpush1.msra.mxu0 0.0
          %913 = vmatprep.subr.mxu0 0.0
          %914 = vmatpush1.msra.mxu0 0.0
          %915 = vmatprep.subr.mxu0 0.0
          %916 = vmatpush1.msra.mxu0 0.0
          %917 = vmatprep.subr.mxu0 0.0
          %918 = vmatpush1.msra.mxu0 0.0
          %919 = vmatprep.subr.mxu0 0.0
          %920 = vmatpush1.msra.mxu0 0.0
          %921 = vmatprep.subr.mxu0 0.0
          %922 = vmatpush1.msra.mxu0 0.0
          %923 = vmatprep.subr.mxu0 0.0
          %924 = vmatpush1.msra.mxu0 0.0
          %925 = vmatprep.subr.mxu0 0.0
          %926 = vmatpush1.msra.mxu0 0.0
          %927 = vmatprep.subr.mxu0 0.0
          %928 = vmatpush1.msra.mxu0 0.0
          %929 = vmatprep.subr.mxu0 0.0
          %930 = vmatpush1.msra.mxu0 0.0
          %931 = vmatprep.subr.mxu0 0.0
          %932 = vmatpush1.msra.mxu0 0.0
          %933 = vmatprep.subr.mxu0 0.0
          %934 = vmatpush1.msra.mxu0 0.0
          %935 = vmatprep.subr.mxu0 0.0
          %936 = vmatpush1.msra.mxu0 0.0
          %937 = vmatprep.subr.mxu0 0.0
          %938 = vmatpush1.msra.mxu0 0.0
          %939 = vmatprep.subr.mxu0 0.0
          %940 = vmatpush1.msra.mxu0 0.0
          %941 = vmatprep.subr.mxu0 0.0
          %942 = vmatpush1.msra.mxu0 0.0
          %943 = vmatprep.subr.mxu0 0.0
          %944 = vmatpush1.msra.mxu0 0.0
          %945 = vmatprep.subr.mxu0 0.0
          %946 = vmatpush1.msra.mxu0 0.0
          %947 = vmatprep.subr.mxu0 0.0
          %948 = vmatpush1.msra.mxu0 0.0
          %949 = vmatprep.subr.mxu0 0.0
          %950 = vmatpush1.msra.mxu0 0.0
          %951 = vmatprep.subr.mxu0 0.0
          %952 = vmatpush1.msra.mxu0 0.0
          %953 = vmatprep.subr.mxu0 0.0
          %954 = vmatpush1.msra.mxu0 0.0
          %955 = vmatprep.subr.mxu0 0.0
          %956 = vmatpush1.msra.mxu0 0.0
          %957 = vmatprep.subr.mxu0 0.0
          %958 = vmatpush1.msra.mxu0 0.0
          %959 = vmatprep.subr.mxu0 0.0
          %960 = vmatpush1.msra.mxu0 0.0
          %961 = vmatprep.subr.mxu0 0.0
          %962 = vmatpush1.msra.mxu0 0.0
          %963 = vmatprep.mubr.f32.mxu0 0.0
          %964 = vmatmul.mubr.f32.gmra.mrb[0].mxu0 %v897
          %v965 = vpop.f32.mrb[0].mxu0
          %v966 = vadd.f32 0.0, %v965
          %v967 = vpop.f32.mrb[0].mxu0
          %968 = vdwg.mxu0
          %v970 = vsel %vm340, %v966, 0
          %972 = vmatprep.subr.mxu0 0.0
          %973 = vmatpush1.msra.mxu0 %v893
          %974 = vmatprep.subr.mxu0 0.0
          %975 = vmatpush1.msra.mxu0 0.0
          %976 = vmatprep.subr.mxu0 0.0
          %977 = vmatpush1.msra.mxu0 0.0
          %978 = vmatprep.subr.mxu0 0.0
          %979 = vmatpush1.msra.mxu0 0.0
          %980 = vmatprep.subr.mxu0 0.0
          %981 = vmatpush1.msra.mxu0 0.0
          %982 = vmatprep.subr.mxu0 0.0
          %983 = vmatpush1.msra.mxu0 0.0
          %984 = vmatprep.subr.mxu0 0.0
          %985 = vmatpush1.msra.mxu0 0.0
          %986 = vmatprep.subr.mxu0 0.0
          %987 = vmatpush1.msra.mxu0 0.0
          %988 = vmatprep.subr.mxu0 0.0
          %989 = vmatpush1.msra.mxu0 0.0
          %990 = vmatprep.subr.mxu0 0.0
          %991 = vmatpush1.msra.mxu0 0.0
          %992 = vmatprep.subr.mxu0 0.0
          %993 = vmatpush1.msra.mxu0 0.0
          %994 = vmatprep.subr.mxu0 0.0
          %995 = vmatpush1.msra.mxu0 0.0
          %996 = vmatprep.subr.mxu0 0.0
          %997 = vmatpush1.msra.mxu0 0.0
          %998 = vmatprep.subr.mxu0 0.0
          %999 = vmatpush1.msra.mxu0 0.0
          %1000 = vmatprep.subr.mxu0 0.0
          %1001 = vmatpush1.msra.mxu0 0.0
          %1002 = vmatprep.subr.mxu0 0.0
          %1003 = vmatpush1.msra.mxu0 0.0
          %1004 = vmatprep.subr.mxu0 0.0
          %1005 = vmatpush1.msra.mxu0 0.0
          %1006 = vmatprep.subr.mxu0 0.0
          %1007 = vmatpush1.msra.mxu0 0.0
          %1008 = vmatprep.subr.mxu0 0.0
          %1009 = vmatpush1.msra.mxu0 0.0
          %1010 = vmatprep.subr.mxu0 0.0
          %1011 = vmatpush1.msra.mxu0 0.0
          %1012 = vmatprep.subr.mxu0 0.0
          %1013 = vmatpush1.msra.mxu0 0.0
          %1014 = vmatprep.subr.mxu0 0.0
          %1015 = vmatpush1.msra.mxu0 0.0
          %1016 = vmatprep.subr.mxu0 0.0
          %1017 = vmatpush1.msra.mxu0 0.0
          %1018 = vmatprep.subr.mxu0 0.0
          %1019 = vmatpush1.msra.mxu0 0.0
          %1020 = vmatprep.subr.mxu0 0.0
          %1021 = vmatpush1.msra.mxu0 0.0
          %1022 = vmatprep.subr.mxu0 0.0
          %1023 = vmatpush1.msra.mxu0 0.0
          %1024 = vmatprep.subr.mxu0 0.0
          %1025 = vmatpush1.msra.mxu0 0.0
          %1026 = vmatprep.subr.mxu0 0.0
          %1027 = vmatpush1.msra.mxu0 0.0
          %1028 = vmatprep.subr.mxu0 0.0
          %1029 = vmatpush1.msra.mxu0 0.0
          %1030 = vmatprep.subr.mxu0 0.0
          %1031 = vmatpush1.msra.mxu0 0.0
          %1032 = vmatprep.subr.mxu0 0.0
          %1033 = vmatpush1.msra.mxu0 0.0
          %1034 = vmatprep.subr.mxu0 0.0
          %1035 = vmatpush1.msra.mxu0 0.0
          %1036 = vmatprep.mubr.f32.mxu0 0.0
          %1037 = vmatmul.mubr.f32.gmra.mrb[0].mxu0 %v970
          %v1038 = vpop.f32.mrb[0].mxu0
          %v1039 = vadd.f32 0.0, %v1038
          %v1040 = vpop.f32.mrb[0].mxu0
          %1041 = vdwg.mxu0
          %v1042 = vsub.f32 %v437, %v1039
          %v1043 = vmul.f32 %v1042, 0.5
          %v1045 = vsel %vm340, %v893, 0
          %1047 = vmatprep.subr.mxu0 0.0
          %1048 = vmatpush1.msra.mxu0 %v1043
          %1049 = vmatprep.subr.mxu0 0.0
          %1050 = vmatpush1.msra.mxu0 0.0
          %1051 = vmatprep.subr.mxu0 0.0
          %1052 = vmatpush1.msra.mxu0 0.0
          %1053 = vmatprep.subr.mxu0 0.0
          %1054 = vmatpush1.msra.mxu0 0.0
          %1055 = vmatprep.subr.mxu0 0.0
          %1056 = vmatpush1.msra.mxu0 0.0
          %1057 = vmatprep.subr.mxu0 0.0
          %1058 = vmatpush1.msra.mxu0 0.0
          %1059 = vmatprep.subr.mxu0 0.0
          %1060 = vmatpush1.msra.mxu0 0.0
          %1061 = vmatprep.subr.mxu0 0.0
          %1062 = vmatpush1.msra.mxu0 0.0
          %1063 = vmatprep.subr.mxu0 0.0
          %1064 = vmatpush1.msra.mxu0 0.0
          %1065 = vmatprep.subr.mxu0 0.0
          %1066 = vmatpush1.msra.mxu0 0.0
          %1067 = vmatprep.subr.mxu0 0.0
          %1068 = vmatpush1.msra.mxu0 0.0
          %1069 = vmatprep.subr.mxu0 0.0
          %1070 = vmatpush1.msra.mxu0 0.0
          %1071 = vmatprep.subr.mxu0 0.0
          %1072 = vmatpush1.msra.mxu0 0.0
          %1073 = vmatprep.subr.mxu0 0.0
          %1074 = vmatpush1.msra.mxu0 0.0
          %1075 = vmatprep.subr.mxu0 0.0
          %1076 = vmatpush1.msra.mxu0 0.0
          %1077 = vmatprep.subr.mxu0 0.0
          %1078 = vmatpush1.msra.mxu0 0.0
          %1079 = vmatprep.subr.mxu0 0.0
          %1080 = vmatpush1.msra.mxu0 0.0
          %1081 = vmatprep.subr.mxu0 0.0
          %1082 = vmatpush1.msra.mxu0 0.0
          %1083 = vmatprep.subr.mxu0 0.0
          %1084 = vmatpush1.msra.mxu0 0.0
          %1085 = vmatprep.subr.mxu0 0.0
          %1086 = vmatpush1.msra.mxu0 0.0
          %1087 = vmatprep.subr.mxu0 0.0
          %1088 = vmatpush1.msra.mxu0 0.0
          %1089 = vmatprep.subr.mxu0 0.0
          %1090 = vmatpush1.msra.mxu0 0.0
          %1091 = vmatprep.subr.mxu0 0.0
          %1092 = vmatpush1.msra.mxu0 0.0
          %1093 = vmatprep.subr.mxu0 0.0
          %1094 = vmatpush1.msra.mxu0 0.0
          %1095 = vmatprep.subr.mxu0 0.0
          %1096 = vmatpush1.msra.mxu0 0.0
          %1097 = vmatprep.subr.mxu0 0.0
          %1098 = vmatpush1.msra.mxu0 0.0
          %1099 = vmatprep.subr.mxu0 0.0
          %1100 = vmatpush1.msra.mxu0 0.0
          %1101 = vmatprep.subr.mxu0 0.0
          %1102 = vmatpush1.msra.mxu0 0.0
          %1103 = vmatprep.subr.mxu0 0.0
          %1104 = vmatpush1.msra.mxu0 0.0
          %1105 = vmatprep.subr.mxu0 0.0
          %1106 = vmatpush1.msra.mxu0 0.0
          %1107 = vmatprep.subr.mxu0 0.0
          %1108 = vmatpush1.msra.mxu0 0.0
          %1109 = vmatprep.subr.mxu0 0.0
          %1110 = vmatpush1.msra.mxu0 0.0
          %1111 = vmatprep.mubr.f32.mxu0 0.0
          %1112 = vmatmul.mubr.f32.gmra.mrb[0].mxu0 %v1045
          %v1113 = vpop.f32.mrb[0].mxu0
          %v1114 = vadd.f32 0.0, %v1113
          %v1115 = vpop.f32.mrb[0].mxu0
          %1116 = vdwg.mxu0
          %v1118 = vsel %vm340, %v1043, 0
          %1120 = vmatprep.subr.mxu0 0.0
          %1121 = vmatpush1.msra.mxu0 %v966
          %1122 = vmatprep.subr.mxu0 0.0
          %1123 = vmatpush1.msra.mxu0 0.0
          %1124 = vmatprep.subr.mxu0 0.0
          %1125 = vmatpush1.msra.mxu0 0.0
          %1126 = vmatprep.subr.mxu0 0.0
          %1127 = vmatpush1.msra.mxu0 0.0
          %1128 = vmatprep.subr.mxu0 0.0
          %1129 = vmatpush1.msra.mxu0 0.0
          %1130 = vmatprep.subr.mxu0 0.0
          %1131 = vmatpush1.msra.mxu0 0.0
          %1132 = vmatprep.subr.mxu0 0.0
          %1133 = vmatpush1.msra.mxu0 0.0
          %1134 = vmatprep.subr.mxu0 0.0
          %1135 = vmatpush1.msra.mxu0 0.0
          %1136 = vmatprep.subr.mxu0 0.0
          %1137 = vmatpush1.msra.mxu0 0.0
          %1138 = vmatprep.subr.mxu0 0.0
          %1139 = vmatpush1.msra.mxu0 0.0
          %1140 = vmatprep.subr.mxu0 0.0
          %1141 = vmatpush1.msra.mxu0 0.0
          %1142 = vmatprep.subr.mxu0 0.0
          %1143 = vmatpush1.msra.mxu0 0.0
          %1144 = vmatprep.subr.mxu0 0.0
          %1145 = vmatpush1.msra.mxu0 0.0
          %1146 = vmatprep.subr.mxu0 0.0
          %1147 = vmatpush1.msra.mxu0 0.0
          %1148 = vmatprep.subr.mxu0 0.0
          %1149 = vmatpush1.msra.mxu0 0.0
          %1150 = vmatprep.subr.mxu0 0.0
          %1151 = vmatpush1.msra.mxu0 0.0
          %1152 = vmatprep.subr.mxu0 0.0
          %1153 = vmatpush1.msra.mxu0 0.0
          %1154 = vmatprep.subr.mxu0 0.0
          %1155 = vmatpush1.msra.mxu0 0.0
          %1156 = vmatprep.subr.mxu0 0.0
          %1157 = vmatpush1.msra.mxu0 0.0
          %1158 = vmatprep.subr.mxu0 0.0
          %1159 = vmatpush1.msra.mxu0 0.0
          %1160 = vmatprep.subr.mxu0 0.0
          %1161 = vmatpush1.msra.mxu0 0.0
          %1162 = vmatprep.subr.mxu0 0.0
          %1163 = vmatpush1.msra.mxu0 0.0
          %1164 = vmatprep.subr.mxu0 0.0
          %1165 = vmatpush1.msra.mxu0 0.0
          %1166 = vmatprep.subr.mxu0 0.0
          %1167 = vmatpush1.msra.mxu0 0.0
          %1168 = vmatprep.subr.mxu0 0.0
          %1169 = vmatpush1.msra.mxu0 0.0
          %1170 = vmatprep.subr.mxu0 0.0
          %1171 = vmatpush1.msra.mxu0 0.0
          %1172 = vmatprep.subr.mxu0 0.0
          %1173 = vmatpush1.msra.mxu0 0.0
          %1174 = vmatprep.subr.mxu0 0.0
          %1175 = vmatpush1.msra.mxu0 0.0
          %1176 = vmatprep.subr.mxu0 0.0
          %1177 = vmatpush1.msra.mxu0 0.0
          %1178 = vmatprep.subr.mxu0 0.0
          %1179 = vmatpush1.msra.mxu0 0.0
          %1180 = vmatprep.subr.mxu0 0.0
          %1181 = vmatpush1.msra.mxu0 0.0
          %1182 = vmatprep.subr.mxu0 0.0
          %1183 = vmatpush1.msra.mxu0 0.0
          %1184 = vmatprep.mubr.f32.mxu0 0.0
          %1185 = vmatmul.mubr.f32.gmra.mrb[0].mxu0 %v1118
          %v1186 = vpop.f32.mrb[0].mxu0
          %v1187 = vadd.f32 0.0, %v1186
          %v1188 = vpop.f32.mrb[0].mxu0
          %1189 = vdwg.mxu0
          %v1191 = vsel %vm340, %v1187, 0
          %1193 = vmatprep.subr.mxu0 0.0
          %1194 = vmatpush1.msra.mxu0 %v1114
          %1195 = vmatprep.subr.mxu0 0.0
          %1196 = vmatpush1.msra.mxu0 0.0
          %1197 = vmatprep.subr.mxu0 0.0
          %1198 = vmatpush1.msra.mxu0 0.0
          %1199 = vmatprep.subr.mxu0 0.0
          %1200 = vmatpush1.msra.mxu0 0.0
          %1201 = vmatprep.subr.mxu0 0.0
          %1202 = vmatpush1.msra.mxu0 0.0
          %1203 = vmatprep.subr.mxu0 0.0
          %1204 = vmatpush1.msra.mxu0 0.0
          %1205 = vmatprep.subr.mxu0 0.0
          %1206 = vmatpush1.msra.mxu0 0.0
          %1207 = vmatprep.subr.mxu0 0.0
          %1208 = vmatpush1.msra.mxu0 0.0
          %1209 = vmatprep.subr.mxu0 0.0
          %1210 = vmatpush1.msra.mxu0 0.0
          %1211 = vmatprep.subr.mxu0 0.0
          %1212 = vmatpush1.msra.mxu0 0.0
          %1213 = vmatprep.subr.mxu0 0.0
          %1214 = vmatpush1.msra.mxu0 0.0
          %1215 = vmatprep.subr.mxu0 0.0
          %1216 = vmatpush1.msra.mxu0 0.0
          %1217 = vmatprep.subr.mxu0 0.0
          %1218 = vmatpush1.msra.mxu0 0.0
          %1219 = vmatprep.subr.mxu0 0.0
          %1220 = vmatpush1.msra.mxu0 0.0
          %1221 = vmatprep.subr.mxu0 0.0
          %1222 = vmatpush1.msra.mxu0 0.0
          %1223 = vmatprep.subr.mxu0 0.0
          %1224 = vmatpush1.msra.mxu0 0.0
          %1225 = vmatprep.subr.mxu0 0.0
          %1226 = vmatpush1.msra.mxu0 0.0
          %1227 = vmatprep.subr.mxu0 0.0
          %1228 = vmatpush1.msra.mxu0 0.0
          %1229 = vmatprep.subr.mxu0 0.0
          %1230 = vmatpush1.msra.mxu0 0.0
          %1231 = vmatprep.subr.mxu0 0.0
          %1232 = vmatpush1.msra.mxu0 0.0
          %1233 = vmatprep.subr.mxu0 0.0
          %1234 = vmatpush1.msra.mxu0 0.0
          %1235 = vmatprep.subr.mxu0 0.0
          %1236 = vmatpush1.msra.mxu0 0.0
          %1237 = vmatprep.subr.mxu0 0.0
          %1238 = vmatpush1.msra.mxu0 0.0
          %1239 = vmatprep.subr.mxu0 0.0
          %1240 = vmatpush1.msra.mxu0 0.0
          %1241 = vmatprep.subr.mxu0 0.0
          %1242 = vmatpush1.msra.mxu0 0.0
          %1243 = vmatprep.subr.mxu0 0.0
          %1244 = vmatpush1.msra.mxu0 0.0
          %1245 = vmatprep.subr.mxu0 0.0
          %1246 = vmatpush1.msra.mxu0 0.0
          %1247 = vmatprep.subr.mxu0 0.0
          %1248 = vmatpush1.msra.mxu0 0.0
          %1249 = vmatprep.subr.mxu0 0.0
          %1250 = vmatpush1.msra.mxu0 0.0
          %1251 = vmatprep.subr.mxu0 0.0
          %1252 = vmatpush1.msra.mxu0 0.0
          %1253 = vmatprep.subr.mxu0 0.0
          %1254 = vmatpush1.msra.mxu0 0.0
          %1255 = vmatprep.subr.mxu0 0.0
          %1256 = vmatpush1.msra.mxu0 0.0
          %1257 = vmatprep.mubr.f32.mxu0 0.0
          %1258 = vmatmul.mubr.f32.gmra.mrb[0].mxu0 %v1191
          %v1259 = vpop.f32.mrb[0].mxu0
          %v1260 = vadd.f32 0.0, %v1259
          %v1261 = vpop.f32.mrb[0].mxu0
          %1262 = vdwg.mxu0
          %v1263 = vsub.f32 %v437, %v1260
          %v1265 = vsel %vm340, %v1114, 0
          %1267 = vmatprep.subr.mxu0 0.0
          %1268 = vmatpush1.msra.mxu0 %v1263
          %1269 = vmatprep.subr.mxu0 0.0
          %1270 = vmatpush1.msra.mxu0 0.0
          %1271 = vmatprep.subr.mxu0 0.0
          %1272 = vmatpush1.msra.mxu0 0.0
          %1273 = vmatprep.subr.mxu0 0.0
          %1274 = vmatpush1.msra.mxu0 0.0
          %1275 = vmatprep.subr.mxu0 0.0
          %1276 = vmatpush1.msra.mxu0 0.0
          %1277 = vmatprep.subr.mxu0 0.0
          %1278 = vmatpush1.msra.mxu0 0.0
          %1279 = vmatprep.subr.mxu0 0.0
          %1280 = vmatpush1.msra.mxu0 0.0
          %1281 = vmatprep.subr.mxu0 0.0
          %1282 = vmatpush1.msra.mxu0 0.0
          %1283 = vmatprep.subr.mxu0 0.0
          %1284 = vmatpush1.msra.mxu0 0.0
          %1285 = vmatprep.subr.mxu0 0.0
          %1286 = vmatpush1.msra.mxu0 0.0
          %1287 = vmatprep.subr.mxu0 0.0
          %1288 = vmatpush1.msra.mxu0 0.0
          %1289 = vmatprep.subr.mxu0 0.0
          %1290 = vmatpush1.msra.mxu0 0.0
          %1291 = vmatprep.subr.mxu0 0.0
          %1292 = vmatpush1.msra.mxu0 0.0
          %1293 = vmatprep.subr.mxu0 0.0
          %1294 = vmatpush1.msra.mxu0 0.0
          %1295 = vmatprep.subr.mxu0 0.0
          %1296 = vmatpush1.msra.mxu0 0.0
          %1297 = vmatprep.subr.mxu0 0.0
          %1298 = vmatpush1.msra.mxu0 0.0
          %1299 = vmatprep.subr.mxu0 0.0
          %1300 = vmatpush1.msra.mxu0 0.0
          %1301 = vmatprep.subr.mxu0 0.0
          %1302 = vmatpush1.msra.mxu0 0.0
          %1303 = vmatprep.subr.mxu0 0.0
          %1304 = vmatpush1.msra.mxu0 0.0
          %1305 = vmatprep.subr.mxu0 0.0
          %1306 = vmatpush1.msra.mxu0 0.0
          %1307 = vmatprep.subr.mxu0 0.0
          %1308 = vmatpush1.msra.mxu0 0.0
          %1309 = vmatprep.subr.mxu0 0.0
          %1310 = vmatpush1.msra.mxu0 0.0
          %1311 = vmatprep.subr.mxu0 0.0
          %1312 = vmatpush1.msra.mxu0 0.0
          %1313 = vmatprep.subr.mxu0 0.0
          %1314 = vmatpush1.msra.mxu0 0.0
          %1315 = vmatprep.subr.mxu0 0.0
          %1316 = vmatpush1.msra.mxu0 0.0
          %1317 = vmatprep.subr.mxu0 0.0
          %1318 = vmatpush1.msra.mxu0 0.0
          %1319 = vmatprep.subr.mxu0 0.0
          %1320 = vmatpush1.msra.mxu0 0.0
          %1321 = vmatprep.subr.mxu0 0.0
          %1322 = vmatpush1.msra.mxu0 0.0
          %1323 = vmatprep.subr.mxu0 0.0
          %1324 = vmatpush1.msra.mxu0 0.0
          %1325 = vmatprep.subr.mxu0 0.0
          %1326 = vmatpush1.msra.mxu0 0.0
          %1327 = vmatprep.subr.mxu0 0.0
          %1328 = vmatpush1.msra.mxu0 0.0
          %1329 = vmatprep.subr.mxu0 0.0
          %1330 = vmatpush1.msra.mxu0 0.0
          %1331 = vmatprep.mubr.f32.mxu0 0.0
          %1332 = vmatmul.mubr.f32.gmra.mrb[0].mxu0 %v1265
          %v1333 = vpop.f32.mrb[0].mxu0
          %v1334 = vadd.f32 0.0, %v1333
          %v1335 = vpop.f32.mrb[0].mxu0
          %1336 = vdwg.mxu0
          %v1337 = vmul.f32 %v1334, 0.5
          %v1338 = vrsqrt.pop %v449
          %v1339 = vmul.f32 %v449, %v1338
          %vm1340 = vcmp.eq.f32.partialorder %v449, inf
          %v1341 = vsel %vm1340, %v449, %v1339
          %vm1342 = vcmp.eq.f32.partialorder %v449, 0.0
          %v1343 = vand.u32 %v449, 2147483648
          %v1344 = vsel %vm1342, %v1343, %v1341
          %v1345 = vmul.f32 %v1337, %v1344
          %v1346 = vsel %vm340, %v1345, 0.0
          %v1347 = vrot.slane %v1346, 4
          %v1348 = vadd.f32 %v1346, %v1347
          %v1349 = vrot.slane %v1348, 2
          %v1350 = vadd.f32 %v1348, %v1349
          %v1351 = vrot.slane %v1350, 1
          %v1352 = vadd.f32 %v1350, %v1351
          %v1353 = vrcp.pop 8.0
          %v1354 = vmul.f32 %v1352, %v1353
          %v1355 = vld [vmem:[%s1] sm:$0x3]
          %v1356 = vmul.f32 %v1355, %v1354
          %vm1357 = vcmask 58368
          %v1358 = vsel %vm1357, %v1356, 0.0
          %1359 = vadd.xlane.f32.xlu0 %v1358
          %v1360 = vpop.xlane.xlu0 %1359
          %v1361 = vld [vmem:[%s2] sm:$0x3]
          %v1362 = vadd.f32 %v1360, %v1361
          %v1363 = vmax.f32 %v1362, 0.0
          %v1364 = vld [vmem:[%s3] sm:$0xff]
          %v1365 = vld [vmem:[%s4] sm:$0xff]
          %vm1366 = vcmask 15360
          %v1368 = vsel %vm1366, %v1364, 0
          %vm1370 = vcmask 1041408
          %v1372 = vsel %vm1370, %v1363, 0
          %1374 = vmatprep.subr.mxu0 0.0
          %1375 = vmatpush1.msra.mxu0 %v1372
          %1376 = vmatprep.subr.mxu0 0.0
          %1377 = vmatpush1.msra.mxu0 0.0
          %1378 = vmatprep.subr.mxu0 0.0
          %1379 = vmatpush1.msra.mxu0 0.0
          %1380 = vmatprep.subr.mxu0 0.0
          %1381 = vmatpush1.msra.mxu0 0.0
          %1382 = vmatprep.subr.mxu0 0.0
          %1383 = vmatpush1.msra.mxu0 0.0
          %1384 = vmatprep.subr.mxu0 0.0
          %1385 = vmatpush1.msra.mxu0 0.0
          %1386 = vmatprep.subr.mxu0 0.0
          %1387 = vmatpush1.msra.mxu0 0.0
          %1388 = vmatprep.subr.mxu0 0.0
          %1389 = vmatpush1.msra.mxu0 0.0
          %1390 = vmatprep.subr.mxu0 0.0
          %1391 = vmatpush1.msra.mxu0 0.0
          %1392 = vmatprep.subr.mxu0 0.0
          %1393 = vmatpush1.msra.mxu0 0.0
          %1394 = vmatprep.subr.mxu0 0.0
          %1395 = vmatpush1.msra.mxu0 0.0
          %1396 = vmatprep.subr.mxu0 0.0
          %1397 = vmatpush1.msra.mxu0 0.0
          %1398 = vmatprep.subr.mxu0 0.0
          %1399 = vmatpush1.msra.mxu0 0.0
          %1400 = vmatprep.subr.mxu0 0.0
          %1401 = vmatpush1.msra.mxu0 0.0
          %1402 = vmatprep.subr.mxu0 0.0
          %1403 = vmatpush1.msra.mxu0 0.0
          %1404 = vmatprep.subr.mxu0 0.0
          %1405 = vmatpush1.msra.mxu0 0.0
          %1406 = vmatprep.subr.mxu0 0.0
          %1407 = vmatpush1.msra.mxu0 0.0
          %1408 = vmatprep.subr.mxu0 0.0
          %1409 = vmatpush1.msra.mxu0 0.0
          %1410 = vmatprep.subr.mxu0 0.0
          %1411 = vmatpush1.msra.mxu0 0.0
          %1412 = vmatprep.subr.mxu0 0.0
          %1413 = vmatpush1.msra.mxu0 0.0
          %1414 = vmatprep.subr.mxu0 0.0
          %1415 = vmatpush1.msra.mxu0 0.0
          %1416 = vmatprep.subr.mxu0 0.0
          %1417 = vmatpush1.msra.mxu0 0.0
          %1418 = vmatprep.subr.mxu0 0.0
          %1419 = vmatpush1.msra.mxu0 0.0
          %1420 = vmatprep.subr.mxu0 0.0
          %1421 = vmatpush1.msra.mxu0 0.0
          %1422 = vmatprep.subr.mxu0 0.0
          %1423 = vmatpush1.msra.mxu0 0.0
          %1424 = vmatprep.subr.mxu0 0.0
          %1425 = vmatpush1.msra.mxu0 0.0
          %1426 = vmatprep.subr.mxu0 0.0
          %1427 = vmatpush1.msra.mxu0 0.0
          %1428 = vmatprep.subr.mxu0 0.0
          %1429 = vmatpush1.msra.mxu0 0.0
          %1430 = vmatprep.subr.mxu0 0.0
          %1431 = vmatpush1.msra.mxu0 0.0
          %1432 = vmatprep.subr.mxu0 0.0
          %1433 = vmatpush1.msra.mxu0 0.0
          %1434 = vmatprep.subr.mxu0 0.0
          %1435 = vmatpush1.msra.mxu0 0.0
          %1436 = vmatprep.subr.mxu0 0.0
          %1437 = vmatpush1.msra.mxu0 0.0
          %1438 = vmatprep.mubr.f32.mxu0 0.0
          %1439 = vmatmul.mubr.f32.gmra.mrb[0].mxu0 %v1368
          %v1440 = vpop.f32.mrb[0].mxu0
          %v1441 = vadd.f32 %v1365, %v1440
          %v1442 = vpop.f32.mrb[0].mxu0
          %1443 = vdwg.mxu0
          %v1444 = vxor.u32 %v1441, 2147483648
          %v1445 = vmul.f32 %v1444, 1.442695
          %v1446 = vpow.pop %v1445
          %v1447 = vadd.f32 %v1446, 1.0
          %v1448 = vrcp.pop %v1447
          %v1449 = vmul.f32 1.0, %v1448
          %1450 = vst.msk [vmem:[%s257] sm:$0xff] %vm347, %v1449
        $region52: #{tpu_custom_call.1} parent=39 // pred_fallthru
          _
        %p1451 = scmp.lt.s32.totalorder %s23, 1
        %s1452 = scalar_select %p1451, %s23, 1
        %s1453 = smul.addr %s1452, 8
        %s1454 = scalar_lea.vmem %s5, %s1453
        // Predicated region
        $region53: #{tpu_custom_call.1} parent=39 // pred_check
          %p1455 = pneg %p161
        $region54: #{tpu_custom_call.1} parent=39 // pred_check_branch
          %1457 = sbr.rel (%p1455) target = $region56
        $region55: #{tpu_custom_call.1} parent=39 // pred_region
          _
        $region56: #{tpu_custom_call.1} parent=39 // pred_fallthru
          _
      $region40: #{tpu_custom_call.1} parent=5 // pred_fallthru
        _
      %p1458 = scmp.le.s32.totalorder 2, %s14
      // Predicated region
      $region57: #{tpu_custom_call.1} parent=5 // pred_check
        %p1459 = pneg %p1458
      $region58: #{tpu_custom_call.1} parent=5 // pred_check_branch
        %1461 = sbr.rel (%p1459) target = $region60
      $region59: #{tpu_custom_call.1} parent=5 // pred_region
        %s1462 = ssub.s32 %s14, 2
        // Predicated region
        $region61: #{tpu_custom_call.1} parent=59 // pred_check
          %p1463 = pneg %p167
        $region62: #{tpu_custom_call.1} parent=59 // pred_check_branch
          %1465 = sbr.rel (%p1463) target = $region64
        $region63: #{tpu_custom_call.1} parent=59 // pred_region
          %p1466 = scmp.lt.s32.totalorder %s25, 1
          %s1467 = scalar_select %p1466, %s25, 1
          %s1468 = smul.addr %s1467, 8
          %s1469 = scalar_lea.vmem %s5, %s1468
        $region64: #{tpu_custom_call.1} parent=59 // pred_fallthru
          _
      $region60: #{tpu_custom_call.1} parent=5 // pred_fallthru
        _
    $region6: #{tpu_custom_call.1} parent=1 // loop_footer
      %s18 = sadd.s32 1, %s14
    $region7: #{tpu_custom_call.1} parent=1 // loop_footer_branch
      %13 = sbr.rel target = $region3
    $region8: #{tpu_custom_call.1} parent=1 // loop_exit
      _
    %1470 = vsyncpa [#allocation5], 1
    %s1471 = scalar_lea.sflag [#allocation5], 1
    %1472 = vsyncpa %s1471, 1

</llo_original>
